<compile_context>
chip_gen: v7x
topology: tpu7x:2x2x1
jax: 0.10.0
libtpu: 0.0.40
codegen_flags: <defaults>
</compile_context>

<pallas_src>
import math
import jax
import jax.numpy as jnp
from jax.experimental import pallas as pl
from jax.experimental.pallas import tpu as pltpu

STYLESPACE_DIMENSIONS = [512 for _ in range(15)] + [256, 256, 256] + \
                        [128, 128, 128] + [64, 64, 64] + [32, 32]
NUM_BLOCKS = 6
NUM_LAYERS = 2 * NUM_BLOCKS          # two EqualLinear layers per residual block
LRELU_SLOPE = 0.2
FUSED_SCALE = math.sqrt(2.0)


def group_kernel(x_ref, w_ref, b_ref, o_ref, acc_ref):
    """One residual block of one mapper per grid step.

    Grid = (G mappers, NUM_BLOCKS residual blocks); block axis is innermost.
    x_ref:   (B, D) f32       same block for every blk of a given mapper
    w_ref:   (2, D, D) bf16   pre-scaled, pre-transposed weights of this block
    b_ref:   (2, 1, D) f32    pre-scaled biases of this block
    o_ref:   (B, D) f32       written only on the last block
    acc_ref: (B, D) f32 VMEM scratch carrying the activation across blocks
    """
    blk = pl.program_id(1)

    @pl.when(blk == 0)
    def _():
        x0 = x_ref[...].astype(jnp.float32)
        # PixelNorm over the channel dim
        acc_ref[...] = x0 * jax.lax.rsqrt(
            jnp.mean(x0 * x0, axis=-1, keepdims=True) + 1e-8)

    x = acc_ref[...]
    res = x
    for j in range(2):
        w = w_ref[j].astype(jnp.float32)
        h = jnp.dot(x, w, preferred_element_type=jnp.float32)
        h = h + b_ref[j].astype(jnp.float32)
        # fused leaky relu: negative_slope=0.2, then * sqrt(2)
        x = jnp.where(h >= 0.0, h, LRELU_SLOPE * h) * FUSED_SCALE
        # TODO(synk): training-mode dropout (p=0.1) between the two linears is
        # not implemented; eval-mode (identity) semantics are used.
    acc_ref[...] = x + res

    @pl.when(blk == NUM_BLOCKS - 1)
    def _():
        o_ref[...] = acc_ref[...].astype(o_ref.dtype)


def run_group(x_stack, w_stack, b_stack):
    """Run all G mappers sharing one latent dim D in a single pipelined call."""
    G, B, D = x_stack.shape
    assert w_stack.shape == (G, NUM_LAYERS, D, D)
    assert b_stack.shape == (G, NUM_LAYERS, 1, D)

    bytes_accessed = int(w_stack.size) * w_stack.dtype.itemsize \
        + int(b_stack.size) * b_stack.dtype.itemsize \
        + 2 * int(x_stack.size) * x_stack.dtype.itemsize
    cost = pl.CostEstimate(
        flops=2 * G * NUM_LAYERS * B * D * D,
        transcendentals=G * B,
        bytes_accessed=bytes_accessed,
    )

    return pl.pallas_call(
        group_kernel,
        out_shape=jax.ShapeDtypeStruct((G, B, D), x_stack.dtype),
        grid=(G, NUM_BLOCKS),
        in_specs=[
            pl.BlockSpec((None, B, D), lambda g, blk: (g, 0, 0)),
            pl.BlockSpec((None, 2, D, D), lambda g, blk: (g, blk, 0, 0)),
            pl.BlockSpec((None, 2, 1, D), lambda g, blk: (g, blk, 0, 0)),
        ],
        out_specs=pl.BlockSpec((None, B, D), lambda g, blk: (g, 0, 0)),
        scratch_shapes=[pltpu.VMEM((B, D), jnp.float32)],
        compiler_params=pltpu.CompilerParams(
            dimension_semantics=("parallel", "arbitrary")),
        cost_estimate=cost,
    )(x_stack, w_stack, b_stack)


def full_stylespace_mapper(x_list, params):
    """x_list: list of (B, C, 1, 1) style codes; params: list of (w_eff, b_eff).

    Mappers with equal latent dim are batched into one fused pallas_call to
    kill per-launch overhead and keep the weight-DMA pipeline saturated.
    """
    groups = {}
    for c, D in enumerate(STYLESPACE_DIMENSIONS):
        groups.setdefault(D, []).append(c)

    out = [None] * len(x_list)
    for D, idxs in groups.items():
        B = x_list[idxs[0]].shape[0]
        x_stack = jnp.stack([x_list[c].reshape(B, D) for c in idxs])   # (G,B,D)
        w_stack = jnp.stack([params[c][0] for c in idxs])              # (G,12,D,D) bf16
        b_stack = jnp.stack([params[c][1] for c in idxs])              # (G,12,1,D) f32
        y = run_group(x_stack, w_stack, b_stack)                       # (G,B,D)
        for gi, c in enumerate(idxs):
            out[c] = y[gi].reshape(x_list[c].shape)
    return out


def ref_mapper(x2d, w_eff, b_eff):
    """Pure-JAX reference of one Mapper (eval mode), same bf16 weights."""
    x = x2d.astype(jnp.float32)
    x = x * jax.lax.rsqrt(jnp.mean(x * x, axis=-1, keepdims=True) + 1e-8)
    w = w_eff.astype(jnp.float32)
    b = b_eff.astype(jnp.float32)
    for blk in range(NUM_BLOCKS):
        res = x
        for j in range(2):
            idx = 2 * blk + j
            h = jnp.dot(x, w[idx], preferred_element_type=jnp.float32,
                        precision=jax.lax.Precision.HIGHEST)
            h = h + b[idx]
            x = jnp.where(h >= 0.0, h, LRELU_SLOPE * h) * FUSED_SCALE
        x = x + res
    return x


def init_params_and_inputs(key, batch):
    """Deterministic synthetic parameters matching the PyTorch module shapes.

    EqualLinear scaling (lr_mul=0.01, scale=lr_mul/sqrt(in_dim)) and the
    weight transpose are pre-folded:
      w_eff = (W_raw * scale).T  with W_raw ~ N(0, 1/lr_mul^2)  ->  N(0, 1/in_dim)
      b_eff = b_raw * lr_mul     (nonzero here so the bias path is exercised)
    Weights are stored in bf16 (HBM-bandwidth-bound workload); biases in f32.
    """
    lr_mul = 0.01
    keys = jax.random.split(key, len(STYLESPACE_DIMENSIONS))
    x_list, params = [], []
    for c, D in enumerate(STYLESPACE_DIMENSIONS):
        kx, kw, kb = jax.random.split(keys[c], 3)
        x_c = jax.random.normal(kx, (batch, D, 1, 1), jnp.float32)
        w_eff = (jax.random.normal(kw, (NUM_LAYERS, D, D), jnp.float32)
                 * (1.0 / math.sqrt(D))).astype(jnp.bfloat16)
        b_eff = jax.random.normal(kb, (NUM_LAYERS, 1, D), jnp.float32) * lr_mul
        x_list.append(x_c)
        params.append((w_eff, b_eff))
    return x_list, params


if __name__ == "__main__":
    key = jax.random.PRNGKey(0)
    B = 2
    x_list, params = init_params_and_inputs(key, B)

    outs = full_stylespace_mapper(x_list, params)
    outs = [jax.block_until_ready(o) for o in outs]

    # sanity check every mapper against the pure-JAX reference
    for c in range(len(STYLESPACE_DIMENSIONS)):
        w_eff, b_eff = params[c]
        got = outs[c].reshape(B, -1)
        want = ref_mapper(x_list[c].reshape(B, -1), w_eff, b_eff)
        assert outs[c].shape == x_list[c].shape
        assert outs[c].dtype == jnp.float32
        assert jnp.allclose(got, want, rtol=1e-2, atol=1e-2), f"mismatch on mapper_{c}"

    print("KERNEL_OK")
</pallas_src>

<mosaic_0001>
module attributes {stable_mosaic.version = 11 : i64} {
  func.func @group_kernel(%arg0: i32, %arg1: i32, %arg2: memref<1x2x512xf32, #tpu.memory_space<vmem>>, %arg3: memref<1x2x512x512xbf16, #tpu.memory_space<vmem>>, %arg4: memref<1x2x1x512xf32, #tpu.memory_space<vmem>>, %arg5: memref<1x2x512xf32, #tpu.memory_space<vmem>>, %arg6: memref<2x512xf32, #tpu.memory_space<vmem>>) attributes {dimension_semantics = [#tpu.dimension_semantics<parallel>, #tpu.dimension_semantics<arbitrary>], iteration_bounds = array<i64: 15, 6>, scalar_prefetch = 0 : i64, scratch_operands = 1 : i64, tpu.core_type = #tpu.core_type<tc>, window_params = [{transform_indices = @transform_0, window_bounds = array<i64: 1, 2, 512>}, {transform_indices = @transform_1, window_bounds = array<i64: 1, 2, 512, 512>}, {transform_indices = @transform_2, window_bounds = array<i64: 1, 2, 1, 512>}, {transform_indices = @transform_3, window_bounds = array<i64: 1, 2, 512>}]} {
    %c0_i32 = arith.constant 0 : i32
    %0 = arith.cmpi eq, %arg1, %c0_i32 : i32
    %1 = arith.extui %0 : i1 to i32
    %c0_i32_0 = arith.constant 0 : i32
    %2 = arith.cmpi ne, %1, %c0_i32_0 : i32
    scf.if %2 {
      %c0_27 = arith.constant 0 : index
      %c0_28 = arith.constant 0 : index
      %c0_29 = arith.constant 0 : index
      %39 = vector.load %arg2[%c0_27, %c0_28, %c0_29] : memref<1x2x512xf32, #tpu.memory_space<vmem>>, vector<1x2x512xf32>
      %40 = vector.shape_cast %39 : vector<1x2x512xf32> to vector<2x512xf32>
      %41 = arith.mulf %40, %40 : vector<2x512xf32>
      %cst_30 = arith.constant dense<0.000000e+00> : vector<2xf32>
      %42 = vector.multi_reduction <add>, %41, %cst_30 [1] : vector<2x512xf32> to vector<2xf32>
      %43 = vector.shape_cast %42 : vector<2xf32> to vector<2x1xf32>
      %cst_31 = arith.constant 5.120000e+02 : f32
      %44 = vector.broadcast %cst_31 : f32 to vector<2x1xf32>
      %45 = arith.divf %43, %44 : vector<2x1xf32>
      %cst_32 = arith.constant 9.99999993E-9 : f32
      %46 = vector.broadcast %cst_32 : f32 to vector<2x1xf32>
      %47 = arith.addf %45, %46 : vector<2x1xf32>
      %48 = math.rsqrt %47 : vector<2x1xf32>
      %49 = vector.broadcast %48 : vector<2x1xf32> to vector<2x512xf32>
      %50 = arith.mulf %40, %49 : vector<2x512xf32>
      %c0_33 = arith.constant 0 : index
      %c0_34 = arith.constant 0 : index
      %51 = vector.load %arg6[%c0_33, %c0_34] : memref<2x512xf32, #tpu.memory_space<vmem>>, vector<2x512xf32>
      tpu.vector_store %arg6[%c0_33, %c0_34], %50 {strides = array<i32>} : memref<2x512xf32, #tpu.memory_space<vmem>>, vector<2x512xf32>,
    } else {
    }
    %c0 = arith.constant 0 : index
    %c0_1 = arith.constant 0 : index
    %3 = vector.load %arg6[%c0, %c0_1] : memref<2x512xf32, #tpu.memory_space<vmem>>, vector<2x512xf32>
    %c0_2 = arith.constant 0 : index
    %c0_3 = arith.constant 0 : index
    %c0_4 = arith.constant 0 : index
    %c0_5 = arith.constant 0 : index
    %4 = vector.load %arg3[%c0_2, %c0_3, %c0_4, %c0_5] : memref<1x2x512x512xbf16, #tpu.memory_space<vmem>>, vector<1x1x512x512xbf16>
    %5 = vector.shape_cast %4 : vector<1x1x512x512xbf16> to vector<512x512xbf16>
    %6 = arith.extf %5 : vector<512x512xbf16> to vector<512x512xf32>
    %cst = arith.constant dense<0.000000e+00> : vector<2x512xf32>
    %7 = tpu.matmul %3, %6, %cst {dimension_numbers = #tpu.dot_dimension_numbers<[1], [0], [0], [1], [0, 0, 1, 1], [], []>} : vector<2x512xf32>, vector<512x512xf32>, vector<2x512xf32> -> vector<2x512xf32>
    %c0_6 = arith.constant 0 : index
    %c0_7 = arith.constant 0 : index
    %c0_8 = arith.constant 0 : index
    %c0_9 = arith.constant 0 : index
    %8 = vector.load %arg4[%c0_6, %c0_7, %c0_8, %c0_9] : memref<1x2x1x512xf32, #tpu.memory_space<vmem>>, vector<1x1x1x512xf32>
    %9 = vector.shape_cast %8 : vector<1x1x1x512xf32> to vector<1x512xf32>
    %10 = vector.broadcast %9 : vector<1x512xf32> to vector<2x512xf32>
    %11 = arith.addf %7, %10 : vector<2x512xf32>
    %cst_10 = arith.constant 0.000000e+00 : f32
    %12 = vector.broadcast %cst_10 : f32 to vector<2x512xf32>
    %13 = arith.cmpf oge, %11, %12 : vector<2x512xf32>
    %cst_11 = arith.constant 2.000000e-01 : f32
    %14 = vector.broadcast %cst_11 : f32 to vector<2x512xf32>
    %15 = arith.mulf %14, %11 : vector<2x512xf32>
    %16 = arith.select %13, %11, %15 : vector<2x512xi1>, vector<2x512xf32>
    %cst_12 = arith.constant 1.41421354 : f32
    %17 = vector.broadcast %cst_12 : f32 to vector<2x512xf32>
    %18 = arith.mulf %16, %17 : vector<2x512xf32>
    %c0_13 = arith.constant 0 : index
    %c1 = arith.constant 1 : index
    %c0_14 = arith.constant 0 : index
    %c0_15 = arith.constant 0 : index
    %19 = vector.load %arg3[%c0_13, %c1, %c0_14, %c0_15] : memref<1x2x512x512xbf16, #tpu.memory_space<vmem>>, vector<1x1x512x512xbf16>
    %20 = vector.shape_cast %19 : vector<1x1x512x512xbf16> to vector<512x512xbf16>
    %21 = arith.extf %20 : vector<512x512xbf16> to vector<512x512xf32>
    %cst_16 = arith.constant dense<0.000000e+00> : vector<2x512xf32>
    %22 = tpu.matmul %18, %21, %cst_16 {dimension_numbers = #tpu.dot_dimension_numbers<[1], [0], [0], [1], [0, 0, 1, 1], [], []>} : vector<2x512xf32>, vector<512x512xf32>, vector<2x512xf32> -> vector<2x512xf32>
    %c0_17 = arith.constant 0 : index
    %c1_18 = arith.constant 1 : index
    %c0_19 = arith.constant 0 : index
    %c0_20 = arith.constant 0 : index
    %23 = vector.load %arg4[%c0_17, %c1_18, %c0_19, %c0_20] : memref<1x2x1x512xf32, #tpu.memory_space<vmem>>, vector<1x1x1x512xf32>
    %24 = vector.shape_cast %23 : vector<1x1x1x512xf32> to vector<1x512xf32>
    %25 = vector.broadcast %24 : vector<1x512xf32> to vector<2x512xf32>
    %26 = arith.addf %22, %25 : vector<2x512xf32>
    %cst_21 = arith.constant 0.000000e+00 : f32
    %27 = vector.broadcast %cst_21 : f32 to vector<2x512xf32>
    %28 = arith.cmpf oge, %26, %27 : vector<2x512xf32>
    %cst_22 = arith.constant 2.000000e-01 : f32
    %29 = vector.broadcast %cst_22 : f32 to vector<2x512xf32>
    %30 = arith.mulf %29, %26 : vector<2x512xf32>
    %31 = arith.select %28, %26, %30 : vector<2x512xi1>, vector<2x512xf32>
    %cst_23 = arith.constant 1.41421354 : f32
    %32 = vector.broadcast %cst_23 : f32 to vector<2x512xf32>
    %33 = arith.mulf %31, %32 : vector<2x512xf32>
    %34 = arith.addf %33, %3 : vector<2x512xf32>
    %c0_24 = arith.constant 0 : index
    %c0_25 = arith.constant 0 : index
    %35 = vector.load %arg6[%c0_24, %c0_25] : memref<2x512xf32, #tpu.memory_space<vmem>>, vector<2x512xf32>
    tpu.vector_store %arg6[%c0_24, %c0_25], %34 {strides = array<i32>} : memref<2x512xf32, #tpu.memory_space<vmem>>, vector<2x512xf32>,
    %c5_i32 = arith.constant 5 : i32
    %36 = arith.cmpi eq, %arg1, %c5_i32 : i32
    %37 = arith.extui %36 : i1 to i32
    %c0_i32_26 = arith.constant 0 : i32
    %38 = arith.cmpi ne, %37, %c0_i32_26 : i32
    scf.if %38 {
      %c0_27 = arith.constant 0 : index
      %c0_28 = arith.constant 0 : index
      %39 = vector.load %arg6[%c0_27, %c0_28] : memref<2x512xf32, #tpu.memory_space<vmem>>, vector<2x512xf32>
      %c0_29 = arith.constant 0 : index
      %c0_30 = arith.constant 0 : index
      %c0_31 = arith.constant 0 : index
      %40 = vector.load %arg5[%c0_29, %c0_30, %c0_31] : memref<1x2x512xf32, #tpu.memory_space<vmem>>, vector<1x2x512xf32>
      %41 = vector.shape_cast %40 : vector<1x2x512xf32> to vector<2x512xf32>
      %42 = vector.shape_cast %39 : vector<2x512xf32> to vector<1x2x512xf32>
      tpu.vector_store %arg5[%c0_29, %c0_30, %c0_31], %42 {strides = array<i32>} : memref<1x2x512xf32, #tpu.memory_space<vmem>>, vector<1x2x512xf32>,
    } else {
    }
    return
  }
  func.func @transform_0(%arg0: i32, %arg1: i32) -> (i32, i32, i32) {
    %c0_i32 = arith.constant 0 : i32
    %c0_i32_0 = arith.constant 0 : i32
    %c0_i32_1 = arith.constant 0 : i32
    return %arg0, %c0_i32, %c0_i32_0 : i32, i32, i32
  }
  func.func @transform_1(%arg0: i32, %arg1: i32) -> (i32, i32, i32, i32) {
    %c0_i32 = arith.constant 0 : i32
    %c0_i32_0 = arith.constant 0 : i32
    %c0_i32_1 = arith.constant 0 : i32
    return %arg0, %arg1, %c0_i32, %c0_i32_0 : i32, i32, i32, i32
  }
  func.func @transform_2(%arg0: i32, %arg1: i32) -> (i32, i32, i32, i32) {
    %c0_i32 = arith.constant 0 : i32
    %c0_i32_0 = arith.constant 0 : i32
    %c0_i32_1 = arith.constant 0 : i32
    return %arg0, %arg1, %c0_i32, %c0_i32_0 : i32, i32, i32, i32
  }
  func.func @transform_3(%arg0: i32, %arg1: i32) -> (i32, i32, i32) {
    %c0_i32 = arith.constant 0 : i32
    %c0_i32_0 = arith.constant 0 : i32
    %c0_i32_1 = arith.constant 0 : i32
    return %arg0, %c0_i32, %c0_i32_0 : i32, i32, i32
  }
}

</mosaic_0001>

<llo_original>
// kernel: tpu_custom_call.1
$region0: #{tpu_custom_call.1}
  #allocation0 [shape = 'u32[]', space=smem, size = 0x4, offset = 0x4, fixed_abs, tag = 'smem constant byte address 0x4 - core index']
  #allocation1 [shape = 'u32[144,128]{1,0:T(1,128)}', space=vmem, size = 0x12000, scoped, tag = 'internal scratch']
  #allocation2 [shape = 'f32[2,512]{1,0:T(2,128)}', space=vmem, size = 0x1000, scoped, tag = 'scratch operand']
  %s0 = inlined_call_operand.hbm [shape: f32[15,2,512], index: 0, kind: input, shape index: {}]
  %s1 = inlined_call_operand.hbm [shape: bf16[15,12,512,512], index: 1, kind: input, shape index: {}]
  %s2 = inlined_call_operand.hbm [shape: f32[15,12,1,512], index: 2, kind: input, shape index: {}]
  %s3 = inlined_call_operand.hbm [shape: f32[15,2,512], index: 3, kind: output, shape index: {}]
  %s4 = sld [smem:[#allocation0]]
  $region65: #{tpu_custom_call.1} parent=0
    _
  %s6 = ssub.s32 1, %s4
  %s7 = scalar_select 0, %s6, %s4
  $region1: #{tpu_custom_call.1} parent=0
    #allocation3 [shape = 'u8[8192]{0}', space=vmem, size = 0x2000, scoped, tag = 'input window, operand 0']
    #allocation4 [shape = 's32[2]{0}', space=sflag, size = 0x8, scoped, tag = 'scoped memory for tpu_custom_call.1']
    #allocation5 [shape = 's32[2]{0}', space=sflag, size = 0x8, scoped, tag = 'scoped memory for tpu_custom_call.1']
    #allocation6 [shape = 'u8[2097152]{0}', space=vmem, size = 0x200000, scoped, tag = 'input window, operand 1']
    #allocation7 [shape = 's32[2]{0}', space=sflag, size = 0x8, scoped, tag = 'scoped memory for tpu_custom_call.1']
    #allocation8 [shape = 'u8[8192]{0}', space=vmem, size = 0x2000, scoped, tag = 'input window, operand 2']
    #allocation9 [shape = 'u8[8192]{0}', space=vmem, size = 0x2000, scoped, tag = 'output window, operand 0']
    %8 = vsyncpa [#allocation4], 0
    %s9 = scalar_lea.sflag [#allocation4], 1
    %10 = vsyncpa %s9, 0
    %11 = vsyncpa [#allocation7], 0
    %s12 = scalar_lea.sflag [#allocation7], 1
    %13 = vsyncpa %s12, 0
    %14 = vsyncpa [#allocation5], 0
    %s15 = scalar_lea.sflag [#allocation5], 1
    %16 = vsyncpa %s15, 0
    loop: start=0, step=1, limit=92
    $region2: #{tpu_custom_call.1} parent=1 // loop_pre_header
      _
    $region3: #{tpu_custom_call.1} parent=1 // loop_header
      %s18 = sphi 0, %s22
      %p19 = scmp.ge.s32.totalorder %s18, 92
      %s25 = sphi 0, %s37
      %s26 = sphi 0, %s33
      %s27 = sphi 0, %s25
      %s28 = sphi 0, %s26
      %s29 = sphi 0, %s27
      %s30 = sphi 0, %s28
      %s40 = sphi 0, %s42
      %s43 = sphi 0, %s40
      %s44 = sphi 0, %s43
      %s60 = sphi 0, %s44
      %s68 = sphi 0, %s70
      %s71 = sphi 0, %s68
      %s72 = sphi 0, %s71
      %s88 = sphi 0, %s72
      %s96 = sphi 0, %s98
      %s99 = sphi 0, %s96
      %s100 = sphi 0, %s99
      %s116 = sphi 0, %s100
      %s122 = sphi 0, %s124
      %s125 = sphi 0, %s122
      %s126 = sphi 0, %s125
      %s142 = sphi 0, %s126
    $region4: #{tpu_custom_call.1} parent=1 // loop_header_branch
      %21 = sbr.rel (%p19) target = $region8
    $region5: #{tpu_custom_call.1} parent=1 // loop_body
      %s23 = ssub.s32 %s18, 1
      %s24 = ssub.s32 %s18, 2
      %s31 = sadd.s32 1, %s26
      %p32 = scmp.ge.s32.totalorder %s31, 6
      %s33 = scalar_select %p32, 0, %s31
      %s34 = sadd.s32 1, %s25
      %s35 = scalar_select %p32, %s34, %s25
      %p36 = scmp.ge.s32.totalorder %s35, 15
      %s37 = scalar_select %p36, 0, %s35
      %s38 = ssub.s32 %s25, %s37
      %p39 = scmp.eq.s32.totalorder %s38, 0
      %s41 = sadd.s32 %s40, 1
      %s42 = scalar_select %p39, %s40, %s41
      %p45 = pneg %p39
      %p46 = scmp.eq.s32.totalorder %s18, 89
      %p47 = por %p45, %p46
      %p48 = scmp.ne.s32.totalorder %s40, %s43
      %p49 = scmp.eq.s32.totalorder %s18, 0
      %p50 = por %p48, %p49
      %p51 = scmp.ne.s32.totalorder %s40, %s43
      %p52 = scmp.eq.s32.totalorder %s23, 89
      %p53 = por %p51, %p52
      %p54 = scmp.ne.s32.totalorder %s43, %s44
      %p55 = scmp.eq.s32.totalorder %s23, 0
      %p56 = por %p54, %p55
      %p57 = scmp.ne.s32.totalorder %s43, %s44
      %p58 = scmp.eq.s32.totalorder %s24, 89
      %p59 = por %p57, %p58
      %p61 = scmp.ne.s32.totalorder %s44, %s60
      %p62 = scmp.eq.s32.totalorder %s24, 0
      %p63 = por %p61, %p62
      %s64 = ssub.s32 %s25, %s37
      %s65 = ssub.s32 %s26, %s33
      %s66 = sor.u32 %s64, %s65
      %p67 = scmp.eq.s32.totalorder %s66, 0
      %s69 = sadd.s32 %s68, 1
      %s70 = scalar_select %p67, %s68, %s69
      %p73 = pneg %p67
      %p74 = scmp.eq.s32.totalorder %s18, 89
      %p75 = por %p73, %p74
      %p76 = scmp.ne.s32.totalorder %s68, %s71
      %p77 = scmp.eq.s32.totalorder %s18, 0
      %p78 = por %p76, %p77
      %p79 = scmp.ne.s32.totalorder %s68, %s71
      %p80 = scmp.eq.s32.totalorder %s23, 89
      %p81 = por %p79, %p80
      %p82 = scmp.ne.s32.totalorder %s71, %s72
      %p83 = scmp.eq.s32.totalorder %s23, 0
      %p84 = por %p82, %p83
      %p85 = scmp.ne.s32.totalorder %s71, %s72
      %p86 = scmp.eq.s32.totalorder %s24, 89
      %p87 = por %p85, %p86
      %p89 = scmp.ne.s32.totalorder %s72, %s88
      %p90 = scmp.eq.s32.totalorder %s24, 0
      %p91 = por %p89, %p90
      %s92 = ssub.s32 %s25, %s37
      %s93 = ssub.s32 %s26, %s33
      %s94 = sor.u32 %s92, %s93
      %p95 = scmp.eq.s32.totalorder %s94, 0
      %s97 = sadd.s32 %s96, 1
      %s98 = scalar_select %p95, %s96, %s97
      %p101 = pneg %p95
      %p102 = scmp.eq.s32.totalorder %s18, 89
      %p103 = por %p101, %p102
      %p104 = scmp.ne.s32.totalorder %s96, %s99
      %p105 = scmp.eq.s32.totalorder %s18, 0
      %p106 = por %p104, %p105
      %p107 = scmp.ne.s32.totalorder %s96, %s99
      %p108 = scmp.eq.s32.totalorder %s23, 89
      %p109 = por %p107, %p108
      %p110 = scmp.ne.s32.totalorder %s99, %s100
      %p111 = scmp.eq.s32.totalorder %s23, 0
      %p112 = por %p110, %p111
      %p113 = scmp.ne.s32.totalorder %s99, %s100
      %p114 = scmp.eq.s32.totalorder %s24, 89
      %p115 = por %p113, %p114
      %p117 = scmp.ne.s32.totalorder %s100, %s116
      %p118 = scmp.eq.s32.totalorder %s24, 0
      %p119 = por %p117, %p118
      %s120 = ssub.s32 %s25, %s37
      %p121 = scmp.eq.s32.totalorder %s120, 0
      %s123 = sadd.s32 %s122, 1
      %s124 = scalar_select %p121, %s122, %s123
      %p127 = pneg %p121
      %p128 = scmp.eq.s32.totalorder %s18, 89
      %p129 = por %p127, %p128
      %p130 = scmp.ne.s32.totalorder %s122, %s125
      %p131 = scmp.eq.s32.totalorder %s18, 0
      %p132 = por %p130, %p131
      %p133 = scmp.ne.s32.totalorder %s122, %s125
      %p134 = scmp.eq.s32.totalorder %s23, 89
      %p135 = por %p133, %p134
      %p136 = scmp.ne.s32.totalorder %s125, %s126
      %p137 = scmp.eq.s32.totalorder %s23, 0
      %p138 = por %p136, %p137
      %p139 = scmp.ne.s32.totalorder %s125, %s126
      %p140 = scmp.eq.s32.totalorder %s24, 89
      %p141 = por %p139, %p140
      %p143 = scmp.ne.s32.totalorder %s126, %s142
      %p144 = scmp.eq.s32.totalorder %s24, 0
      %p145 = por %p143, %p144
      %p146 = scmp.le.s32.totalorder 1, %s18
      %p147 = scmp.lt.s32.totalorder %s18, 91
      %p148 = pnand %p146, %p147
      %p149 = pneg %p148
      // Predicated region
      $region9: #{tpu_custom_call.1} parent=5 // pred_check
        _
      $region10: #{tpu_custom_call.1} parent=5 // pred_check_branch
        %151 = sbr.rel (%p148) target = $region12
      $region11: #{tpu_custom_call.1} parent=5 // pred_region
        %s152 = ssub.s32 %s18, 1
      $region12: #{tpu_custom_call.1} parent=5 // pred_fallthru
        _
      %p153 = scmp.lt.s32.totalorder %s18, 90
      // Predicated region
      $region13: #{tpu_custom_call.1} parent=5 // pred_check
        %p154 = pneg %p153
      $region14: #{tpu_custom_call.1} parent=5 // pred_check_branch
        %156 = sbr.rel (%p154) target = $region16
      $region15: #{tpu_custom_call.1} parent=5 // pred_region
        // Predicated region
        $region17: #{tpu_custom_call.1} parent=15 // pred_check
          %p157 = pneg %p50
        $region18: #{tpu_custom_call.1} parent=15 // pred_check_branch
          %159 = sbr.rel (%p157) target = $region20
        $region19: #{tpu_custom_call.1} parent=15 // pred_region
          %s160 = sand.u32 %s40, 1
          %s161 = scalar_lea.sflag [#allocation4], %s160
          %s162 = sand.u32 %s40, 1
          %s163 = smul.addr %s162, 8
          %s164 = scalar_lea.vmem [#allocation3], %s163
          %s166 = ssub.s32 128, 128
          %167 = vsyncadd %s161, %s166
          %s168 = smul.addr %s25, 4
          %s169 = smul.addr %s168, 32
          %s170 = scalar_lea.hbm %s0, %s169
          %s172 = sshll.u32 %s164, 4
          %s173 = int_to_ptr.vmem [resolvable:$true] %s172
          %175 = dma.hbm_to_vmem [thread:$0]  %s170, 128, %s173, %s161
        $region20: #{tpu_custom_call.1} parent=15 // pred_fallthru
          _
        // Predicated region
        $region21: #{tpu_custom_call.1} parent=15 // pred_check
          %p176 = pneg %p78
        $region22: #{tpu_custom_call.1} parent=15 // pred_check_branch
          %178 = sbr.rel (%p176) target = $region24
        $region23: #{tpu_custom_call.1} parent=15 // pred_region
          %s179 = sand.u32 %s18, 1
          %s180 = scalar_lea.sflag [#allocation7], %s179
          %s181 = sand.u32 %s68, 1
          %s182 = smul.addr %s181, 2048
          %s183 = scalar_lea.vmem [#allocation6], %s182
          %s184 = smul.u32 2, %s26
          %s186 = ssub.s32 32768, 32768
          %187 = vsyncadd %s180, %s186
          %s188 = smul.addr %s184, 256
          %s189 = smul.addr %s25, 3072
          %s190 = sadd.s32 %s188, %s189
          %s191 = smul.addr %s190, 64
          %s192 = scalar_lea.hbm %s1, %s191
          %s193 = sshll.u32 %s183, 4
          %s194 = int_to_ptr.vmem [resolvable:$true] %s193
          %199 = dma.hbm_to_vmem [thread:$0]  %s192, 32768, %s194, %s180, 256, 256, 16
        $region24: #{tpu_custom_call.1} parent=15 // pred_fallthru
          _
        // Predicated region
        $region25: #{tpu_custom_call.1} parent=15 // pred_check
          %p200 = pneg %p106
        $region26: #{tpu_custom_call.1} parent=15 // pred_check_branch
          %202 = sbr.rel (%p200) target = $region28
        $region27: #{tpu_custom_call.1} parent=15 // pred_region
          %s203 = sand.u32 %s18, 1
          %s204 = scalar_lea.sflag [#allocation7], %s203
          %s205 = sand.u32 %s96, 1
          %s206 = smul.addr %s205, 8
          %s207 = scalar_lea.vmem [#allocation8], %s206
          %s208 = smul.u32 2, %s26
          %s210 = ssub.s32 128, 128
          %211 = vsyncadd %s204, %s210
          %s212 = smul.addr %s208, 4
          %s213 = smul.addr %s25, 48
          %s214 = sadd.s32 %s212, %s213
          %s215 = smul.addr %s214, 16
          %s216 = scalar_lea.hbm %s2, %s215
          %s217 = sshll.u32 %s207, 4
          %s218 = int_to_ptr.vmem [resolvable:$true] %s217
          %223 = dma.hbm_to_vmem [thread:$0]  %s216, 128, %s218, %s204, 64, 64, 4
        $region28: #{tpu_custom_call.1} parent=15 // pred_fallthru
          _
      $region16: #{tpu_custom_call.1} parent=5 // pred_fallthru
        _
      %p224 = scmp.le.s32.totalorder 1, %s18
      %p225 = scmp.lt.s32.totalorder %s18, 91
      %p226 = pnand %p224, %p225
      %p227 = pneg %p226
      // Predicated region
      $region29: #{tpu_custom_call.1} parent=5 // pred_check
        _
      $region30: #{tpu_custom_call.1} parent=5 // pred_check_branch
        %229 = sbr.rel (%p226) target = $region32
      $region31: #{tpu_custom_call.1} parent=5 // pred_region
        %s230 = ssub.s32 %s18, 1
        %s231 = sand.u32 %s43, 1
        %s232 = scalar_lea.sflag [#allocation4], %s231
        %s233 = sand.u32 %s43, 1
        %s234 = smul.addr %s233, 8
        %s235 = scalar_lea.vmem [#allocation3], %s234
        // Predicated region
        $region33: #{tpu_custom_call.1} parent=31 // pred_check
          %p236 = pneg %p56
        $region34: #{tpu_custom_call.1} parent=31 // pred_check_branch
          %238 = sbr.rel (%p236) target = $region36
        $region35: #{tpu_custom_call.1} parent=31 // pred_region
          %239 = dma.done %s232, 128
        $region36: #{tpu_custom_call.1} parent=31 // pred_fallthru
          _
        %s240 = sand.u32 %s23, 1
        %s241 = scalar_lea.sflag [#allocation7], %s240
        %s242 = sand.u32 %s71, 1
        %s243 = smul.addr %s242, 2048
        %s244 = scalar_lea.vmem [#allocation6], %s243
        // Predicated region
        $region37: #{tpu_custom_call.1} parent=31 // pred_check
          %p245 = pneg %p84
        $region38: #{tpu_custom_call.1} parent=31 // pred_check_branch
          %247 = sbr.rel (%p245) target = $region40
        $region39: #{tpu_custom_call.1} parent=31 // pred_region
          %248 = dma.done %s241, 32768
        $region40: #{tpu_custom_call.1} parent=31 // pred_fallthru
          _
        %s249 = sand.u32 %s23, 1
        %s250 = scalar_lea.sflag [#allocation7], %s249
        %s251 = sand.u32 %s99, 1
        %s252 = smul.addr %s251, 8
        %s253 = scalar_lea.vmem [#allocation8], %s252
        // Predicated region
        $region41: #{tpu_custom_call.1} parent=31 // pred_check
          %p254 = pneg %p112
        $region42: #{tpu_custom_call.1} parent=31 // pred_check_branch
          %256 = sbr.rel (%p254) target = $region44
        $region43: #{tpu_custom_call.1} parent=31 // pred_region
          %257 = dma.done %s250, 128
        $region44: #{tpu_custom_call.1} parent=31 // pred_fallthru
          _
        %s258 = sand.u32 %s43, 1
        %s259 = scalar_lea.sflag [#allocation4], %s258
        %s260 = sand.u32 %s43, 1
        %s261 = smul.addr %s260, 8
        %s262 = scalar_lea.vmem [#allocation3], %s261
        %p263 = pneg %p56
        %p264 = pneg %p53
        %s265 = sand.u32 %s23, 1
        %s266 = scalar_lea.sflag [#allocation7], %s265
        %s267 = sand.u32 %s71, 1
        %s268 = smul.addr %s267, 2048
        %s269 = scalar_lea.vmem [#allocation6], %s268
        %p270 = pneg %p84
        %p271 = pneg %p81
        %s272 = sand.u32 %s23, 1
        %s273 = scalar_lea.sflag [#allocation7], %s272
        %s274 = sand.u32 %s99, 1
        %s275 = smul.addr %s274, 8
        %s276 = scalar_lea.vmem [#allocation8], %s275
        %p277 = pneg %p112
        %p278 = pneg %p109
        %p279 = pneg %p138
        %p280 = pneg %p135
        %s281 = sand.u32 %s125, 1
        %s282 = scalar_lea.sflag [#allocation5], %s281
        %s283 = sand.u32 %s125, 1
        %s284 = smul.addr %s283, 8
        %s285 = scalar_lea.vmem [#allocation9], %s284
        %s286 = smul.u32 2, %s28
        %s287 = smul.u32 2, %s28
        %p288 = scmp.eq.s32.totalorder %s28, 0
        // Predicated region
        $region45: #{tpu_custom_call.1} parent=31 // pred_check
          %p289 = pneg %p288
        $region46: #{tpu_custom_call.1} parent=31 // pred_check_branch
          %291 = sbr.rel (%p289) target = $region48
        $region47: #{tpu_custom_call.1} parent=31 // pred_region
          %v292 = vld [vmem:[%s235] sm:$0xff]
          %v293 = vmul.f32 %v292, %v292
          %v295 = vcombine.high %v293, %v293
          %v297 = vunpack.c.l.s4 1983009808
          %v298 = vunpack.c.0.s8 %v297
          %v299 = vlaneseq
          %v300 = vshrl.u32 %v299, 7
          %v301 = vsub.s32 %v298, %v300
          %v302 = vrot.slane %v293, %v301
          %v304 = vunpack.c.l.s4 1983009808
          %v305 = vunpack.c.0.s8 %v304
          %v306 = vlaneseq
          %v307 = vshrl.u32 %v306, 7
          %v308 = vsub.s32 %v305, %v307
          %v309 = vrot.slane %v295, %v308
          %v310 = vcombine.high %v302, %v302
          %v311 = vcombine.high %v309, %v309
          %vm316 = vcmask 1041408
          %v317 = vsel %vm316, %v302, 0.0
          %v318 = vsel %vm316, %v310, 0.0
          %v319 = vadd.f32 %v317, %v318
          %v320 = vsel %vm316, %v309, 0.0
          %v321 = vadd.f32 %v319, %v320
          %v322 = vsel %vm316, %v311, 0.0
          %v323 = vadd.f32 %v321, %v322
          %324 = vadd.xlane.f32.xlu0 %v323
          %v325 = vpop.xlane.xlu0 %324
          %v326 = vrcp.pop 512.0
          %v327 = vmul.f32 %v325, %v326
          %v328 = vadd.f32 %v327, 1e-08
          %v329 = vrsqrt.pop %v328
          %v332 = vunpack.c.l.s4 269488144
          %v333 = vunpack.c.0.s8 %v332
          %v334 = vlaneseq
          %v335 = vshrl.u32 %v334, 7
          %v336 = vsub.s32 %v333, %v335
          %v337 = vrot.slane %v329, %v336
          %v339 = vmul.f32 %v292, %v337
          %340 = vst [vmem:[#allocation2] sm:$0xff] %v339
        $region48: #{tpu_custom_call.1} parent=31 // pred_fallthru
          _
        %v341 = vld [vmem:[#allocation2] sm:$0xff]
        %v342 = vld [vmem:[%s244] sm:$0xff]
        %v343 = vld [vmem:[%s244 + $0x8] sm:$0xff]
        %v344 = vld [vmem:[%s244 + $0x10] sm:$0xff]
        %v345 = vld [vmem:[%s244 + $0x18] sm:$0xff]
        %v346 = vld [vmem:[%s244 + $0x20] sm:$0xff]
        %v347 = vld [vmem:[%s244 + $0x28] sm:$0xff]
        %v348 = vld [vmem:[%s244 + $0x30] sm:$0xff]
        %v349 = vld [vmem:[%s244 + $0x38] sm:$0xff]
        %v350 = vld [vmem:[%s244 + $0x40] sm:$0xff]
        %v351 = vld [vmem:[%s244 + $0x48] sm:$0xff]
        %v352 = vld [vmem:[%s244 + $0x50] sm:$0xff]
        %v353 = vld [vmem:[%s244 + $0x58] sm:$0xff]
        %v354 = vld [vmem:[%s244 + $0x60] sm:$0xff]
        %v355 = vld [vmem:[%s244 + $0x68] sm:$0xff]
        %v356 = vld [vmem:[%s244 + $0x70] sm:$0xff]
        %v357 = vld [vmem:[%s244 + $0x78] sm:$0xff]
        %v358 = vld [vmem:[%s244 + $0x80] sm:$0xff]
        %v359 = vld [vmem:[%s244 + $0x88] sm:$0xff]
        %v360 = vld [vmem:[%s244 + $0x90] sm:$0xff]
        %v361 = vld [vmem:[%s244 + $0x98] sm:$0xff]
        %v362 = vld [vmem:[%s244 + $0xa0] sm:$0xff]
        %v363 = vld [vmem:[%s244 + $0xa8] sm:$0xff]
        %v364 = vld [vmem:[%s244 + $0xb0] sm:$0xff]
        %v365 = vld [vmem:[%s244 + $0xb8] sm:$0xff]
        %v366 = vld [vmem:[%s244 + $0xc0] sm:$0xff]
        %v367 = vld [vmem:[%s244 + $0xc8] sm:$0xff]
        %v368 = vld [vmem:[%s244 + $0xd0] sm:$0xff]
        %v369 = vld [vmem:[%s244 + $0xd8] sm:$0xff]
        %v370 = vld [vmem:[%s244 + $0xe0] sm:$0xff]
        %v371 = vld [vmem:[%s244 + $0xe8] sm:$0xff]
        %v372 = vld [vmem:[%s244 + $0xf0] sm:$0xff]
        %v373 = vld [vmem:[%s244 + $0xf8] sm:$0xff]
        %v374 = vld [vmem:[%s244 + $0x100] sm:$0xff]
        %v375 = vld [vmem:[%s244 + $0x108] sm:$0xff]
        %v376 = vld [vmem:[%s244 + $0x110] sm:$0xff]
        %v377 = vld [vmem:[%s244 + $0x118] sm:$0xff]
        %v378 = vld [vmem:[%s244 + $0x120] sm:$0xff]
        %v379 = vld [vmem:[%s244 + $0x128] sm:$0xff]
        %v380 = vld [vmem:[%s244 + $0x130] sm:$0xff]
        %v381 = vld [vmem:[%s244 + $0x138] sm:$0xff]
        %v382 = vld [vmem:[%s244 + $0x140] sm:$0xff]
        %v383 = vld [vmem:[%s244 + $0x148] sm:$0xff]
        %v384 = vld [vmem:[%s244 + $0x150] sm:$0xff]
        %v385 = vld [vmem:[%s244 + $0x158] sm:$0xff]
        %v386 = vld [vmem:[%s244 + $0x160] sm:$0xff]
        %v387 = vld [vmem:[%s244 + $0x168] sm:$0xff]
        %v388 = vld [vmem:[%s244 + $0x170] sm:$0xff]
        %v389 = vld [vmem:[%s244 + $0x178] sm:$0xff]
        %v390 = vld [vmem:[%s244 + $0x180] sm:$0xff]
        %v391 = vld [vmem:[%s244 + $0x188] sm:$0xff]
        %v392 = vld [vmem:[%s244 + $0x190] sm:$0xff]
        %v393 = vld [vmem:[%s244 + $0x198] sm:$0xff]
        %v394 = vld [vmem:[%s244 + $0x1a0] sm:$0xff]
        %v395 = vld [vmem:[%s244 + $0x1a8] sm:$0xff]
        %v396 = vld [vmem:[%s244 + $0x1b0] sm:$0xff]
        %v397 = vld [vmem:[%s244 + $0x1b8] sm:$0xff]
        %v398 = vld [vmem:[%s244 + $0x1c0] sm:$0xff]
        %v399 = vld [vmem:[%s244 + $0x1c8] sm:$0xff]
        %v400 = vld [vmem:[%s244 + $0x1d0] sm:$0xff]
        %v401 = vld [vmem:[%s244 + $0x1d8] sm:$0xff]
        %v402 = vld [vmem:[%s244 + $0x1e0] sm:$0xff]
        %v403 = vld [vmem:[%s244 + $0x1e8] sm:$0xff]
        %v404 = vld [vmem:[%s244 + $0x1f0] sm:$0xff]
        %v405 = vld [vmem:[%s244 + $0x1f8] sm:$0xff]
        %v406 = vld [vmem:[%s244 + $0x200] sm:$0xff]
        %v407 = vld [vmem:[%s244 + $0x208] sm:$0xff]
        %v408 = vld [vmem:[%s244 + $0x210] sm:$0xff]
        %v409 = vld [vmem:[%s244 + $0x218] sm:$0xff]
        %v410 = vld [vmem:[%s244 + $0x220] sm:$0xff]
        %v411 = vld [vmem:[%s244 + $0x228] sm:$0xff]
        %v412 = vld [vmem:[%s244 + $0x230] sm:$0xff]
        %v413 = vld [vmem:[%s244 + $0x238] sm:$0xff]
        %v414 = vld [vmem:[%s244 + $0x240] sm:$0xff]
        %v415 = vld [vmem:[%s244 + $0x248] sm:$0xff]
        %v416 = vld [vmem:[%s244 + $0x250] sm:$0xff]
        %v417 = vld [vmem:[%s244 + $0x258] sm:$0xff]
        %v418 = vld [vmem:[%s244 + $0x260] sm:$0xff]
        %v419 = vld [vmem:[%s244 + $0x268] sm:$0xff]
        %v420 = vld [vmem:[%s244 + $0x270] sm:$0xff]
        %v421 = vld [vmem:[%s244 + $0x278] sm:$0xff]
        %v422 = vld [vmem:[%s244 + $0x280] sm:$0xff]
        %v423 = vld [vmem:[%s244 + $0x288] sm:$0xff]
        %v424 = vld [vmem:[%s244 + $0x290] sm:$0xff]
        %v425 = vld [vmem:[%s244 + $0x298] sm:$0xff]
        %v426 = vld [vmem:[%s244 + $0x2a0] sm:$0xff]
        %v427 = vld [vmem:[%s244 + $0x2a8] sm:$0xff]
        %v428 = vld [vmem:[%s244 + $0x2b0] sm:$0xff]
        %v429 = vld [vmem:[%s244 + $0x2b8] sm:$0xff]
        %v430 = vld [vmem:[%s244 + $0x2c0] sm:$0xff]
        %v431 = vld [vmem:[%s244 + $0x2c8] sm:$0xff]
        %v432 = vld [vmem:[%s244 + $0x2d0] sm:$0xff]
        %v433 = vld [vmem:[%s244 + $0x2d8] sm:$0xff]
        %v434 = vld [vmem:[%s244 + $0x2e0] sm:$0xff]
        %v435 = vld [vmem:[%s244 + $0x2e8] sm:$0xff]
        %v436 = vld [vmem:[%s244 + $0x2f0] sm:$0xff]
        %v437 = vld [vmem:[%s244 + $0x2f8] sm:$0xff]
        %v438 = vld [vmem:[%s244 + $0x300] sm:$0xff]
        %v439 = vld [vmem:[%s244 + $0x308] sm:$0xff]
        %v440 = vld [vmem:[%s244 + $0x310] sm:$0xff]
        %v441 = vld [vmem:[%s244 + $0x318] sm:$0xff]
        %v442 = vld [vmem:[%s244 + $0x320] sm:$0xff]
        %v443 = vld [vmem:[%s244 + $0x328] sm:$0xff]
        %v444 = vld [vmem:[%s244 + $0x330] sm:$0xff]
        %v445 = vld [vmem:[%s244 + $0x338] sm:$0xff]
        %v446 = vld [vmem:[%s244 + $0x340] sm:$0xff]
        %v447 = vld [vmem:[%s244 + $0x348] sm:$0xff]
        %v448 = vld [vmem:[%s244 + $0x350] sm:$0xff]
        %v449 = vld [vmem:[%s244 + $0x358] sm:$0xff]
        %v450 = vld [vmem:[%s244 + $0x360] sm:$0xff]
        %v451 = vld [vmem:[%s244 + $0x368] sm:$0xff]
        %v452 = vld [vmem:[%s244 + $0x370] sm:$0xff]
        %v453 = vld [vmem:[%s244 + $0x378] sm:$0xff]
        %v454 = vld [vmem:[%s244 + $0x380] sm:$0xff]
        %v455 = vld [vmem:[%s244 + $0x388] sm:$0xff]
        %v456 = vld [vmem:[%s244 + $0x390] sm:$0xff]
        %v457 = vld [vmem:[%s244 + $0x398] sm:$0xff]
        %v458 = vld [vmem:[%s244 + $0x3a0] sm:$0xff]
        %v459 = vld [vmem:[%s244 + $0x3a8] sm:$0xff]
        %v460 = vld [vmem:[%s244 + $0x3b0] sm:$0xff]
        %v461 = vld [vmem:[%s244 + $0x3b8] sm:$0xff]
        %v462 = vld [vmem:[%s244 + $0x3c0] sm:$0xff]
        %v463 = vld [vmem:[%s244 + $0x3c8] sm:$0xff]
        %v464 = vld [vmem:[%s244 + $0x3d0] sm:$0xff]
        %v465 = vld [vmem:[%s244 + $0x3d8] sm:$0xff]
        %v466 = vld [vmem:[%s244 + $0x3e0] sm:$0xff]
        %v467 = vld [vmem:[%s244 + $0x3e8] sm:$0xff]
        %v468 = vld [vmem:[%s244 + $0x3f0] sm:$0xff]
        %v469 = vld [vmem:[%s244 + $0x3f8] sm:$0xff]
        %v470 = vunpack.c.l.bf16 %v342
        %v471 = vunpack.c.h.bf16 %v342
        %v472 = vunpack.c.l.bf16 %v343
        %v473 = vunpack.c.h.bf16 %v343
        %v474 = vunpack.c.l.bf16 %v344
        %v475 = vunpack.c.h.bf16 %v344
        %v476 = vunpack.c.l.bf16 %v345
        %v477 = vunpack.c.h.bf16 %v345
        %v478 = vunpack.c.l.bf16 %v346
        %v479 = vunpack.c.h.bf16 %v346
        %v480 = vunpack.c.l.bf16 %v347
        %v481 = vunpack.c.h.bf16 %v347
        %v482 = vunpack.c.l.bf16 %v348
        %v483 = vunpack.c.h.bf16 %v348
        %v484 = vunpack.c.l.bf16 %v349
        %v485 = vunpack.c.h.bf16 %v349
        %v486 = vunpack.c.l.bf16 %v350
        %v487 = vunpack.c.h.bf16 %v350
        %v488 = vunpack.c.l.bf16 %v351
        %v489 = vunpack.c.h.bf16 %v351
        %v490 = vunpack.c.l.bf16 %v352
        %v491 = vunpack.c.h.bf16 %v352
        %v492 = vunpack.c.l.bf16 %v353
        %v493 = vunpack.c.h.bf16 %v353
        %v494 = vunpack.c.l.bf16 %v354
        %v495 = vunpack.c.h.bf16 %v354
        %v496 = vunpack.c.l.bf16 %v355
        %v497 = vunpack.c.h.bf16 %v355
        %v498 = vunpack.c.l.bf16 %v356
        %v499 = vunpack.c.h.bf16 %v356
        %v500 = vunpack.c.l.bf16 %v357
        %v501 = vunpack.c.h.bf16 %v357
        %v502 = vunpack.c.l.bf16 %v358
        %v503 = vunpack.c.h.bf16 %v358
        %v504 = vunpack.c.l.bf16 %v359
        %v505 = vunpack.c.h.bf16 %v359
        %v506 = vunpack.c.l.bf16 %v360
        %v507 = vunpack.c.h.bf16 %v360
        %v508 = vunpack.c.l.bf16 %v361
        %v509 = vunpack.c.h.bf16 %v361
        %v510 = vunpack.c.l.bf16 %v362
        %v511 = vunpack.c.h.bf16 %v362
        %v512 = vunpack.c.l.bf16 %v363
        %v513 = vunpack.c.h.bf16 %v363
        %v514 = vunpack.c.l.bf16 %v364
        %v515 = vunpack.c.h.bf16 %v364
        %v516 = vunpack.c.l.bf16 %v365
        %v517 = vunpack.c.h.bf16 %v365
        %v518 = vunpack.c.l.bf16 %v366
        %v519 = vunpack.c.h.bf16 %v366
        %v520 = vunpack.c.l.bf16 %v367
        %v521 = vunpack.c.h.bf16 %v367
        %v522 = vunpack.c.l.bf16 %v368
        %v523 = vunpack.c.h.bf16 %v368
        %v524 = vunpack.c.l.bf16 %v369
        %v525 = vunpack.c.h.bf16 %v369
        %v526 = vunpack.c.l.bf16 %v370
        %v527 = vunpack.c.h.bf16 %v370
        %v528 = vunpack.c.l.bf16 %v371
        %v529 = vunpack.c.h.bf16 %v371
        %v530 = vunpack.c.l.bf16 %v372
        %v531 = vunpack.c.h.bf16 %v372
        %v532 = vunpack.c.l.bf16 %v373
        %v533 = vunpack.c.h.bf16 %v373
        %v534 = vunpack.c.l.bf16 %v374
        %v535 = vunpack.c.h.bf16 %v374
        %v536 = vunpack.c.l.bf16 %v375
        %v537 = vunpack.c.h.bf16 %v375
        %v538 = vunpack.c.l.bf16 %v376
        %v539 = vunpack.c.h.bf16 %v376
        %v540 = vunpack.c.l.bf16 %v377
        %v541 = vunpack.c.h.bf16 %v377
        %v542 = vunpack.c.l.bf16 %v378
        %v543 = vunpack.c.h.bf16 %v378
        %v544 = vunpack.c.l.bf16 %v379
        %v545 = vunpack.c.h.bf16 %v379
        %v546 = vunpack.c.l.bf16 %v380
        %v547 = vunpack.c.h.bf16 %v380
        %v548 = vunpack.c.l.bf16 %v381
        %v549 = vunpack.c.h.bf16 %v381
        %v550 = vunpack.c.l.bf16 %v382
        %v551 = vunpack.c.h.bf16 %v382
        %v552 = vunpack.c.l.bf16 %v383
        %v553 = vunpack.c.h.bf16 %v383
        %v554 = vunpack.c.l.bf16 %v384
        %v555 = vunpack.c.h.bf16 %v384
        %v556 = vunpack.c.l.bf16 %v385
        %v557 = vunpack.c.h.bf16 %v385
        %v558 = vunpack.c.l.bf16 %v386
        %v559 = vunpack.c.h.bf16 %v386
        %v560 = vunpack.c.l.bf16 %v387
        %v561 = vunpack.c.h.bf16 %v387
        %v562 = vunpack.c.l.bf16 %v388
        %v563 = vunpack.c.h.bf16 %v388
        %v564 = vunpack.c.l.bf16 %v389
        %v565 = vunpack.c.h.bf16 %v389
        %v566 = vunpack.c.l.bf16 %v390
        %v567 = vunpack.c.h.bf16 %v390
        %v568 = vunpack.c.l.bf16 %v391
        %v569 = vunpack.c.h.bf16 %v391
        %v570 = vunpack.c.l.bf16 %v392
        %v571 = vunpack.c.h.bf16 %v392
        %v572 = vunpack.c.l.bf16 %v393
        %v573 = vunpack.c.h.bf16 %v393
        %v574 = vunpack.c.l.bf16 %v394
        %v575 = vunpack.c.h.bf16 %v394
        %v576 = vunpack.c.l.bf16 %v395
        %v577 = vunpack.c.h.bf16 %v395
        %v578 = vunpack.c.l.bf16 %v396
        %v579 = vunpack.c.h.bf16 %v396
        %v580 = vunpack.c.l.bf16 %v397
        %v581 = vunpack.c.h.bf16 %v397
        %v582 = vunpack.c.l.bf16 %v398
        %v583 = vunpack.c.h.bf16 %v398
        %v584 = vunpack.c.l.bf16 %v399
        %v585 = vunpack.c.h.bf16 %v399
        %v586 = vunpack.c.l.bf16 %v400
        %v587 = vunpack.c.h.bf16 %v400
        %v588 = vunpack.c.l.bf16 %v401
        %v589 = vunpack.c.h.bf16 %v401
        %v590 = vunpack.c.l.bf16 %v402
        %v591 = vunpack.c.h.bf16 %v402
        %v592 = vunpack.c.l.bf16 %v403
        %v593 = vunpack.c.h.bf16 %v403
        %v594 = vunpack.c.l.bf16 %v404
        %v595 = vunpack.c.h.bf16 %v404
        %v596 = vunpack.c.l.bf16 %v405
        %v597 = vunpack.c.h.bf16 %v405
        %v598 = vunpack.c.l.bf16 %v406
        %v599 = vunpack.c.h.bf16 %v406
        %v600 = vunpack.c.l.bf16 %v407
        %v601 = vunpack.c.h.bf16 %v407
        %v602 = vunpack.c.l.bf16 %v408
        %v603 = vunpack.c.h.bf16 %v408
        %v604 = vunpack.c.l.bf16 %v409
        %v605 = vunpack.c.h.bf16 %v409
        %v606 = vunpack.c.l.bf16 %v410
        %v607 = vunpack.c.h.bf16 %v410
        %v608 = vunpack.c.l.bf16 %v411
        %v609 = vunpack.c.h.bf16 %v411
        %v610 = vunpack.c.l.bf16 %v412
        %v611 = vunpack.c.h.bf16 %v412
        %v612 = vunpack.c.l.bf16 %v413
        %v613 = vunpack.c.h.bf16 %v413
        %v614 = vunpack.c.l.bf16 %v414
        %v615 = vunpack.c.h.bf16 %v414
        %v616 = vunpack.c.l.bf16 %v415
        %v617 = vunpack.c.h.bf16 %v415
        %v618 = vunpack.c.l.bf16 %v416
        %v619 = vunpack.c.h.bf16 %v416
        %v620 = vunpack.c.l.bf16 %v417
        %v621 = vunpack.c.h.bf16 %v417
        %v622 = vunpack.c.l.bf16 %v418
        %v623 = vunpack.c.h.bf16 %v418
        %v624 = vunpack.c.l.bf16 %v419
        %v625 = vunpack.c.h.bf16 %v419
        %v626 = vunpack.c.l.bf16 %v420
        %v627 = vunpack.c.h.bf16 %v420
        %v628 = vunpack.c.l.bf16 %v421
        %v629 = vunpack.c.h.bf16 %v421
        %v630 = vunpack.c.l.bf16 %v422
        %v631 = vunpack.c.h.bf16 %v422
        %v632 = vunpack.c.l.bf16 %v423
        %v633 = vunpack.c.h.bf16 %v423
        %v634 = vunpack.c.l.bf16 %v424
        %v635 = vunpack.c.h.bf16 %v424
        %v636 = vunpack.c.l.bf16 %v425
        %v637 = vunpack.c.h.bf16 %v425
        %v638 = vunpack.c.l.bf16 %v426
        %v639 = vunpack.c.h.bf16 %v426
        %v640 = vunpack.c.l.bf16 %v427
        %v641 = vunpack.c.h.bf16 %v427
        %v642 = vunpack.c.l.bf16 %v428
        %v643 = vunpack.c.h.bf16 %v428
        %v644 = vunpack.c.l.bf16 %v429
        %v645 = vunpack.c.h.bf16 %v429
        %v646 = vunpack.c.l.bf16 %v430
        %v647 = vunpack.c.h.bf16 %v430
        %v648 = vunpack.c.l.bf16 %v431
        %v649 = vunpack.c.h.bf16 %v431
        %v650 = vunpack.c.l.bf16 %v432
        %v651 = vunpack.c.h.bf16 %v432
        %v652 = vunpack.c.l.bf16 %v433
        %v653 = vunpack.c.h.bf16 %v433
        %v654 = vunpack.c.l.bf16 %v434
        %v655 = vunpack.c.h.bf16 %v434
        %v656 = vunpack.c.l.bf16 %v435
        %v657 = vunpack.c.h.bf16 %v435
        %v658 = vunpack.c.l.bf16 %v436
        %v659 = vunpack.c.h.bf16 %v436
        %v660 = vunpack.c.l.bf16 %v437
        %v661 = vunpack.c.h.bf16 %v437
        %v662 = vunpack.c.l.bf16 %v438
        %v663 = vunpack.c.h.bf16 %v438
        %v664 = vunpack.c.l.bf16 %v439
        %v665 = vunpack.c.h.bf16 %v439
        %v666 = vunpack.c.l.bf16 %v440
        %v667 = vunpack.c.h.bf16 %v440
        %v668 = vunpack.c.l.bf16 %v441
        %v669 = vunpack.c.h.bf16 %v441
        %v670 = vunpack.c.l.bf16 %v442
        %v671 = vunpack.c.h.bf16 %v442
        %v672 = vunpack.c.l.bf16 %v443
        %v673 = vunpack.c.h.bf16 %v443
        %v674 = vunpack.c.l.bf16 %v444
        %v675 = vunpack.c.h.bf16 %v444
        %v676 = vunpack.c.l.bf16 %v445
        %v677 = vunpack.c.h.bf16 %v445
        %v678 = vunpack.c.l.bf16 %v446
        %v679 = vunpack.c.h.bf16 %v446
        %v680 = vunpack.c.l.bf16 %v447
        %v681 = vunpack.c.h.bf16 %v447
        %v682 = vunpack.c.l.bf16 %v448
        %v683 = vunpack.c.h.bf16 %v448
        %v684 = vunpack.c.l.bf16 %v449
        %v685 = vunpack.c.h.bf16 %v449
        %v686 = vunpack.c.l.bf16 %v450
        %v687 = vunpack.c.h.bf16 %v450
        %v688 = vunpack.c.l.bf16 %v451
        %v689 = vunpack.c.h.bf16 %v451
        %v690 = vunpack.c.l.bf16 %v452
        %v691 = vunpack.c.h.bf16 %v452
        %v692 = vunpack.c.l.bf16 %v453
        %v693 = vunpack.c.h.bf16 %v453
        %v694 = vunpack.c.l.bf16 %v454
        %v695 = vunpack.c.h.bf16 %v454
        %v696 = vunpack.c.l.bf16 %v455
        %v697 = vunpack.c.h.bf16 %v455
        %v698 = vunpack.c.l.bf16 %v456
        %v699 = vunpack.c.h.bf16 %v456
        %v700 = vunpack.c.l.bf16 %v457
        %v701 = vunpack.c.h.bf16 %v457
        %v702 = vunpack.c.l.bf16 %v458
        %v703 = vunpack.c.h.bf16 %v458
        %v704 = vunpack.c.l.bf16 %v459
        %v705 = vunpack.c.h.bf16 %v459
        %v706 = vunpack.c.l.bf16 %v460
        %v707 = vunpack.c.h.bf16 %v460
        %v708 = vunpack.c.l.bf16 %v461
        %v709 = vunpack.c.h.bf16 %v461
        %v710 = vunpack.c.l.bf16 %v462
        %v711 = vunpack.c.h.bf16 %v462
        %v712 = vunpack.c.l.bf16 %v463
        %v713 = vunpack.c.h.bf16 %v463
        %v714 = vunpack.c.l.bf16 %v464
        %v715 = vunpack.c.h.bf16 %v464
        %v716 = vunpack.c.l.bf16 %v465
        %v717 = vunpack.c.h.bf16 %v465
        %v718 = vunpack.c.l.bf16 %v466
        %v719 = vunpack.c.h.bf16 %v466
        %v720 = vunpack.c.l.bf16 %v467
        %v721 = vunpack.c.h.bf16 %v467
        %v722 = vunpack.c.l.bf16 %v468
        %v723 = vunpack.c.h.bf16 %v468
        %v724 = vunpack.c.l.bf16 %v469
        %v725 = vunpack.c.h.bf16 %v469
        %v726 = vld [vmem:[%s253] sm:$0xf]
        %v728 = vlaneseq
        %v729 = vshrl.u32 %v728, 7
        %v730 = vsub.s32 0, %v729
        %v731 = vrot.slane %v726, %v730
        %v732 = vlaneseq
        %v733 = vshrl.u32 %v732, 7
        %v734 = vsub.s32 1, %v733
        %v735 = vrot.slane %v726, %v734
        %v736 = vlaneseq
        %v737 = vshrl.u32 %v736, 7
        %v738 = vsub.s32 2, %v737
        %v739 = vrot.slane %v726, %v738
        %v740 = vlaneseq
        %v741 = vshrl.u32 %v740, 7
        %v742 = vsub.s32 3, %v741
        %v743 = vrot.slane %v726, %v742
        %v749 = vcombine.high %v341, %v341
        %v751 = vunpack.c.l.s4 1983009808
        %v752 = vunpack.c.0.s8 %v751
        %v753 = vlaneseq
        %v754 = vshrl.u32 %v753, 7
        %v755 = vsub.s32 %v752, %v754
        %v756 = vrot.slane %v341, %v755
        %v758 = vunpack.c.l.s4 1983009808
        %v759 = vunpack.c.0.s8 %v758
        %v760 = vlaneseq
        %v761 = vshrl.u32 %v760, 7
        %v762 = vsub.s32 %v759, %v761
        %v763 = vrot.slane %v749, %v762
        %v764 = vcombine.high %v756, %v756
        %v765 = vcombine.high %v763, %v763
        %770 = vmatprep.subr.mxu0 %v471
        %771 = vmatpush1.msra.mxu0 %v470
        %772 = vmatprep.subr.mxu0 %v475
        %773 = vmatpush1.msra.mxu0 %v474
        %774 = vmatprep.subr.mxu0 %v479
        %775 = vmatpush1.msra.mxu0 %v478
        %776 = vmatprep.subr.mxu0 %v483
        %777 = vmatpush1.msra.mxu0 %v482
        %778 = vmatprep.subr.mxu0 %v487
        %779 = vmatpush1.msra.mxu0 %v486
        %780 = vmatprep.subr.mxu0 %v491
        %781 = vmatpush1.msra.mxu0 %v490
        %782 = vmatprep.subr.mxu0 %v495
        %783 = vmatpush1.msra.mxu0 %v494
        %784 = vmatprep.subr.mxu0 %v499
        %785 = vmatpush1.msra.mxu0 %v498
        %786 = vmatprep.subr.mxu0 %v503
        %787 = vmatpush1.msra.mxu0 %v502
        %788 = vmatprep.subr.mxu0 %v507
        %789 = vmatpush1.msra.mxu0 %v506
        %790 = vmatprep.subr.mxu0 %v511
        %791 = vmatpush1.msra.mxu0 %v510
        %792 = vmatprep.subr.mxu0 %v515
        %793 = vmatpush1.msra.mxu0 %v514
        %794 = vmatprep.subr.mxu0 %v519
        %795 = vmatpush1.msra.mxu0 %v518
        %796 = vmatprep.subr.mxu0 %v523
        %797 = vmatpush1.msra.mxu0 %v522
        %798 = vmatprep.subr.mxu0 %v527
        %799 = vmatpush1.msra.mxu0 %v526
        %800 = vmatprep.subr.mxu0 %v531
        %801 = vmatpush1.msra.mxu0 %v530
        %802 = vmatprep.subr.mxu0 %v535
        %803 = vmatpush1.msra.mxu0 %v534
        %804 = vmatprep.subr.mxu0 %v539
        %805 = vmatpush1.msra.mxu0 %v538
        %806 = vmatprep.subr.mxu0 %v543
        %807 = vmatpush1.msra.mxu0 %v542
        %808 = vmatprep.subr.mxu0 %v547
        %809 = vmatpush1.msra.mxu0 %v546
        %810 = vmatprep.subr.mxu0 %v551
        %811 = vmatpush1.msra.mxu0 %v550
        %812 = vmatprep.subr.mxu0 %v555
        %813 = vmatpush1.msra.mxu0 %v554
        %814 = vmatprep.subr.mxu0 %v559
        %815 = vmatpush1.msra.mxu0 %v558
        %816 = vmatprep.subr.mxu0 %v563
        %817 = vmatpush1.msra.mxu0 %v562
        %818 = vmatprep.subr.mxu0 %v567
        %819 = vmatpush1.msra.mxu0 %v566
        %820 = vmatprep.subr.mxu0 %v571
        %821 = vmatpush1.msra.mxu0 %v570
        %822 = vmatprep.subr.mxu0 %v575
        %823 = vmatpush1.msra.mxu0 %v574
        %824 = vmatprep.subr.mxu0 %v579
        %825 = vmatpush1.msra.mxu0 %v578
        %826 = vmatprep.subr.mxu0 %v583
        %827 = vmatpush1.msra.mxu0 %v582
        %828 = vmatprep.subr.mxu0 %v587
        %829 = vmatpush1.msra.mxu0 %v586
        %830 = vmatprep.subr.mxu0 %v591
        %831 = vmatpush1.msra.mxu0 %v590
        %832 = vmatprep.subr.mxu0 %v595
        %833 = vmatpush1.msra.mxu0 %v594
        %834 = vmatprep.mubr.f32.mxu0 %v764
        %835 = vmatmul.mubr.f32.gmra.mrb[0].mxu0 %v756
        %v836 = vpop.f32.mrb[0].mxu0
        %v837 = vadd.f32 %v731, %v836
        %v838 = vpop.f32.mrb[0].mxu0
        %v839 = vadd.f32 %v735, %v838
        %840 = vdwg.mxu0
        %841 = vmatprep.subr.mxu0 %v599
        %842 = vmatpush1.msra.mxu0 %v598
        %843 = vmatprep.subr.mxu0 %v603
        %844 = vmatpush1.msra.mxu0 %v602
        %845 = vmatprep.subr.mxu0 %v607
        %846 = vmatpush1.msra.mxu0 %v606
        %847 = vmatprep.subr.mxu0 %v611
        %848 = vmatpush1.msra.mxu0 %v610
        %849 = vmatprep.subr.mxu0 %v615
        %850 = vmatpush1.msra.mxu0 %v614
        %851 = vmatprep.subr.mxu0 %v619
        %852 = vmatpush1.msra.mxu0 %v618
        %853 = vmatprep.subr.mxu0 %v623
        %854 = vmatpush1.msra.mxu0 %v622
        %855 = vmatprep.subr.mxu0 %v627
        %856 = vmatpush1.msra.mxu0 %v626
        %857 = vmatprep.subr.mxu0 %v631
        %858 = vmatpush1.msra.mxu0 %v630
        %859 = vmatprep.subr.mxu0 %v635
        %860 = vmatpush1.msra.mxu0 %v634
        %861 = vmatprep.subr.mxu0 %v639
        %862 = vmatpush1.msra.mxu0 %v638
        %863 = vmatprep.subr.mxu0 %v643
        %864 = vmatpush1.msra.mxu0 %v642
        %865 = vmatprep.subr.mxu0 %v647
        %866 = vmatpush1.msra.mxu0 %v646
        %867 = vmatprep.subr.mxu0 %v651
        %868 = vmatpush1.msra.mxu0 %v650
        %869 = vmatprep.subr.mxu0 %v655
        %870 = vmatpush1.msra.mxu0 %v654
        %871 = vmatprep.subr.mxu0 %v659
        %872 = vmatpush1.msra.mxu0 %v658
        %873 = vmatprep.subr.mxu0 %v663
        %874 = vmatpush1.msra.mxu0 %v662
        %875 = vmatprep.subr.mxu0 %v667
        %876 = vmatpush1.msra.mxu0 %v666
        %877 = vmatprep.subr.mxu0 %v671
        %878 = vmatpush1.msra.mxu0 %v670
        %879 = vmatprep.subr.mxu0 %v675
        %880 = vmatpush1.msra.mxu0 %v674
        %881 = vmatprep.subr.mxu0 %v679
        %882 = vmatpush1.msra.mxu0 %v678
        %883 = vmatprep.subr.mxu0 %v683
        %884 = vmatpush1.msra.mxu0 %v682
        %885 = vmatprep.subr.mxu0 %v687
        %886 = vmatpush1.msra.mxu0 %v686
        %887 = vmatprep.subr.mxu0 %v691
        %888 = vmatpush1.msra.mxu0 %v690
        %889 = vmatprep.subr.mxu0 %v695
        %890 = vmatpush1.msra.mxu0 %v694
        %891 = vmatprep.subr.mxu0 %v699
        %892 = vmatpush1.msra.mxu0 %v698
        %893 = vmatprep.subr.mxu0 %v703
        %894 = vmatpush1.msra.mxu0 %v702
        %895 = vmatprep.subr.mxu0 %v707
        %896 = vmatpush1.msra.mxu0 %v706
        %897 = vmatprep.subr.mxu0 %v711
        %898 = vmatpush1.msra.mxu0 %v710
        %899 = vmatprep.subr.mxu0 %v715
        %900 = vmatpush1.msra.mxu0 %v714
        %901 = vmatprep.subr.mxu0 %v719
        %902 = vmatpush1.msra.mxu0 %v718
        %903 = vmatprep.subr.mxu0 %v723
        %904 = vmatpush1.msra.mxu0 %v722
        %905 = vmatprep.mubr.f32.mxu0 %v765
        %906 = vmatmul.mubr.f32.gmra.mrb[0].mxu0 %v763
        %v907 = vpop.f32.mrb[0].mxu0
        %v908 = vadd.f32 %v837, %v907
        %v909 = vpop.f32.mrb[0].mxu0
        %v910 = vadd.f32 %v839, %v909
        %911 = vdwg.mxu0
        %912 = vmatprep.subr.mxu0 %v473
        %913 = vmatpush1.msra.mxu0 %v472
        %914 = vmatprep.subr.mxu0 %v477
        %915 = vmatpush1.msra.mxu0 %v476
        %916 = vmatprep.subr.mxu0 %v481
        %917 = vmatpush1.msra.mxu0 %v480
        %918 = vmatprep.subr.mxu0 %v485
        %919 = vmatpush1.msra.mxu0 %v484
        %920 = vmatprep.subr.mxu0 %v489
        %921 = vmatpush1.msra.mxu0 %v488
        %922 = vmatprep.subr.mxu0 %v493
        %923 = vmatpush1.msra.mxu0 %v492
        %924 = vmatprep.subr.mxu0 %v497
        %925 = vmatpush1.msra.mxu0 %v496
        %926 = vmatprep.subr.mxu0 %v501
        %927 = vmatpush1.msra.mxu0 %v500
        %928 = vmatprep.subr.mxu0 %v505
        %929 = vmatpush1.msra.mxu0 %v504
        %930 = vmatprep.subr.mxu0 %v509
        %931 = vmatpush1.msra.mxu0 %v508
        %932 = vmatprep.subr.mxu0 %v513
        %933 = vmatpush1.msra.mxu0 %v512
        %934 = vmatprep.subr.mxu0 %v517
        %935 = vmatpush1.msra.mxu0 %v516
        %936 = vmatprep.subr.mxu0 %v521
        %937 = vmatpush1.msra.mxu0 %v520
        %938 = vmatprep.subr.mxu0 %v525
        %939 = vmatpush1.msra.mxu0 %v524
        %940 = vmatprep.subr.mxu0 %v529
        %941 = vmatpush1.msra.mxu0 %v528
        %942 = vmatprep.subr.mxu0 %v533
        %943 = vmatpush1.msra.mxu0 %v532
        %944 = vmatprep.subr.mxu0 %v537
        %945 = vmatpush1.msra.mxu0 %v536
        %946 = vmatprep.subr.mxu0 %v541
        %947 = vmatpush1.msra.mxu0 %v540
        %948 = vmatprep.subr.mxu0 %v545
        %949 = vmatpush1.msra.mxu0 %v544
        %950 = vmatprep.subr.mxu0 %v549
        %951 = vmatpush1.msra.mxu0 %v548
        %952 = vmatprep.subr.mxu0 %v553
        %953 = vmatpush1.msra.mxu0 %v552
        %954 = vmatprep.subr.mxu0 %v557
        %955 = vmatpush1.msra.mxu0 %v556
        %956 = vmatprep.subr.mxu0 %v561
        %957 = vmatpush1.msra.mxu0 %v560
        %958 = vmatprep.subr.mxu0 %v565
        %959 = vmatpush1.msra.mxu0 %v564
        %960 = vmatprep.subr.mxu0 %v569
        %961 = vmatpush1.msra.mxu0 %v568
        %962 = vmatprep.subr.mxu0 %v573
        %963 = vmatpush1.msra.mxu0 %v572
        %964 = vmatprep.subr.mxu0 %v577
        %965 = vmatpush1.msra.mxu0 %v576
        %966 = vmatprep.subr.mxu0 %v581
        %967 = vmatpush1.msra.mxu0 %v580
        %968 = vmatprep.subr.mxu0 %v585
        %969 = vmatpush1.msra.mxu0 %v584
        %970 = vmatprep.subr.mxu0 %v589
        %971 = vmatpush1.msra.mxu0 %v588
        %972 = vmatprep.subr.mxu0 %v593
        %973 = vmatpush1.msra.mxu0 %v592
        %974 = vmatprep.subr.mxu0 %v597
        %975 = vmatpush1.msra.mxu0 %v596
        %976 = vmatprep.mubr.f32.mxu0 %v764
        %977 = vmatmul.mubr.f32.gmra.mrb[0].mxu0 %v756
        %v978 = vpop.f32.mrb[0].mxu0
        %v979 = vadd.f32 %v739, %v978
        %v980 = vpop.f32.mrb[0].mxu0
        %v981 = vadd.f32 %v743, %v980
        %982 = vdwg.mxu0
        %983 = vmatprep.subr.mxu0 %v601
        %984 = vmatpush1.msra.mxu0 %v600
        %985 = vmatprep.subr.mxu0 %v605
        %986 = vmatpush1.msra.mxu0 %v604
        %987 = vmatprep.subr.mxu0 %v609
        %988 = vmatpush1.msra.mxu0 %v608
        %989 = vmatprep.subr.mxu0 %v613
        %990 = vmatpush1.msra.mxu0 %v612
        %991 = vmatprep.subr.mxu0 %v617
        %992 = vmatpush1.msra.mxu0 %v616
        %993 = vmatprep.subr.mxu0 %v621
        %994 = vmatpush1.msra.mxu0 %v620
        %995 = vmatprep.subr.mxu0 %v625
        %996 = vmatpush1.msra.mxu0 %v624
        %997 = vmatprep.subr.mxu0 %v629
        %998 = vmatpush1.msra.mxu0 %v628
        %999 = vmatprep.subr.mxu0 %v633
        %1000 = vmatpush1.msra.mxu0 %v632
        %1001 = vmatprep.subr.mxu0 %v637
        %1002 = vmatpush1.msra.mxu0 %v636
        %1003 = vmatprep.subr.mxu0 %v641
        %1004 = vmatpush1.msra.mxu0 %v640
        %1005 = vmatprep.subr.mxu0 %v645
        %1006 = vmatpush1.msra.mxu0 %v644
        %1007 = vmatprep.subr.mxu0 %v649
        %1008 = vmatpush1.msra.mxu0 %v648
        %1009 = vmatprep.subr.mxu0 %v653
        %1010 = vmatpush1.msra.mxu0 %v652
        %1011 = vmatprep.subr.mxu0 %v657
        %1012 = vmatpush1.msra.mxu0 %v656
        %1013 = vmatprep.subr.mxu0 %v661
        %1014 = vmatpush1.msra.mxu0 %v660
        %1015 = vmatprep.subr.mxu0 %v665
        %1016 = vmatpush1.msra.mxu0 %v664
        %1017 = vmatprep.subr.mxu0 %v669
        %1018 = vmatpush1.msra.mxu0 %v668
        %1019 = vmatprep.subr.mxu0 %v673
        %1020 = vmatpush1.msra.mxu0 %v672
        %1021 = vmatprep.subr.mxu0 %v677
        %1022 = vmatpush1.msra.mxu0 %v676
        %1023 = vmatprep.subr.mxu0 %v681
        %1024 = vmatpush1.msra.mxu0 %v680
        %1025 = vmatprep.subr.mxu0 %v685
        %1026 = vmatpush1.msra.mxu0 %v684
        %1027 = vmatprep.subr.mxu0 %v689
        %1028 = vmatpush1.msra.mxu0 %v688
        %1029 = vmatprep.subr.mxu0 %v693
        %1030 = vmatpush1.msra.mxu0 %v692
        %1031 = vmatprep.subr.mxu0 %v697
        %1032 = vmatpush1.msra.mxu0 %v696
        %1033 = vmatprep.subr.mxu0 %v701
        %1034 = vmatpush1.msra.mxu0 %v700
        %1035 = vmatprep.subr.mxu0 %v705
        %1036 = vmatpush1.msra.mxu0 %v704
        %1037 = vmatprep.subr.mxu0 %v709
        %1038 = vmatpush1.msra.mxu0 %v708
        %1039 = vmatprep.subr.mxu0 %v713
        %1040 = vmatpush1.msra.mxu0 %v712
        %1041 = vmatprep.subr.mxu0 %v717
        %1042 = vmatpush1.msra.mxu0 %v716
        %1043 = vmatprep.subr.mxu0 %v721
        %1044 = vmatpush1.msra.mxu0 %v720
        %1045 = vmatprep.subr.mxu0 %v725
        %1046 = vmatpush1.msra.mxu0 %v724
        %1047 = vmatprep.mubr.f32.mxu0 %v765
        %1048 = vmatmul.mubr.f32.gmra.mrb[0].mxu0 %v763
        %v1049 = vpop.f32.mrb[0].mxu0
        %v1050 = vadd.f32 %v979, %v1049
        %v1051 = vpop.f32.mrb[0].mxu0
        %v1052 = vadd.f32 %v981, %v1051
        %1053 = vdwg.mxu0
        %vm1054 = vcmp.ge.f32.partialorder %v908, 0.0
        %vm1055 = vcmp.ge.f32.partialorder %v910, 0.0
        %vm1056 = vcmp.ge.f32.partialorder %v1050, 0.0
        %vm1057 = vcmp.ge.f32.partialorder %v1052, 0.0
        %v1058 = vmul.f32 %v908, 0.2
        %v1059 = vmul.f32 %v910, 0.2
        %v1060 = vmul.f32 %v1050, 0.2
        %v1061 = vmul.f32 %v1052, 0.2
        %v1062 = vsel %vm1054, %v908, %v1058
        %v1063 = vsel %vm1055, %v910, %v1059
        %v1064 = vsel %vm1056, %v1050, %v1060
        %v1065 = vsel %vm1057, %v1052, %v1061
        %v1066 = vmul.f32 %v1062, 1.4142135
        %v1067 = vmul.f32 %v1063, 1.4142135
        %v1068 = vmul.f32 %v1064, 1.4142135
        %v1069 = vmul.f32 %v1065, 1.4142135
        %s1070 = scalar_lea.vmem %s244, 1024 [#allocation6]
        %v1071 = vld [vmem:[%s1070] sm:$0xff]
        %v1072 = vld [vmem:[%s1070 + $0x8] sm:$0xff]
        %v1073 = vld [vmem:[%s1070 + $0x10] sm:$0xff]
        %v1074 = vld [vmem:[%s1070 + $0x18] sm:$0xff]
        %v1075 = vld [vmem:[%s1070 + $0x20] sm:$0xff]
        %v1076 = vld [vmem:[%s1070 + $0x28] sm:$0xff]
        %v1077 = vld [vmem:[%s1070 + $0x30] sm:$0xff]
        %v1078 = vld [vmem:[%s1070 + $0x38] sm:$0xff]
        %v1079 = vld [vmem:[%s1070 + $0x40] sm:$0xff]
        %v1080 = vld [vmem:[%s1070 + $0x48] sm:$0xff]
        %v1081 = vld [vmem:[%s1070 + $0x50] sm:$0xff]
        %v1082 = vld [vmem:[%s1070 + $0x58] sm:$0xff]
        %v1083 = vld [vmem:[%s1070 + $0x60] sm:$0xff]
        %v1084 = vld [vmem:[%s1070 + $0x68] sm:$0xff]
        %v1085 = vld [vmem:[%s1070 + $0x70] sm:$0xff]
        %v1086 = vld [vmem:[%s1070 + $0x78] sm:$0xff]
        %v1087 = vld [vmem:[%s1070 + $0x80] sm:$0xff]
        %v1088 = vld [vmem:[%s1070 + $0x88] sm:$0xff]
        %v1089 = vld [vmem:[%s1070 + $0x90] sm:$0xff]
        %v1090 = vld [vmem:[%s1070 + $0x98] sm:$0xff]
        %v1091 = vld [vmem:[%s1070 + $0xa0] sm:$0xff]
        %v1092 = vld [vmem:[%s1070 + $0xa8] sm:$0xff]
        %v1093 = vld [vmem:[%s1070 + $0xb0] sm:$0xff]
        %v1094 = vld [vmem:[%s1070 + $0xb8] sm:$0xff]
        %v1095 = vld [vmem:[%s1070 + $0xc0] sm:$0xff]
        %v1096 = vld [vmem:[%s1070 + $0xc8] sm:$0xff]
        %v1097 = vld [vmem:[%s1070 + $0xd0] sm:$0xff]
        %v1098 = vld [vmem:[%s1070 + $0xd8] sm:$0xff]
        %v1099 = vld [vmem:[%s1070 + $0xe0] sm:$0xff]
        %v1100 = vld [vmem:[%s1070 + $0xe8] sm:$0xff]
        %v1101 = vld [vmem:[%s1070 + $0xf0] sm:$0xff]
        %v1102 = vld [vmem:[%s1070 + $0xf8] sm:$0xff]
        %v1103 = vld [vmem:[%s1070 + $0x100] sm:$0xff]
        %v1104 = vld [vmem:[%s1070 + $0x108] sm:$0xff]
        %v1105 = vld [vmem:[%s1070 + $0x110] sm:$0xff]
        %v1106 = vld [vmem:[%s1070 + $0x118] sm:$0xff]
        %v1107 = vld [vmem:[%s1070 + $0x120] sm:$0xff]
        %v1108 = vld [vmem:[%s1070 + $0x128] sm:$0xff]
        %v1109 = vld [vmem:[%s1070 + $0x130] sm:$0xff]
        %v1110 = vld [vmem:[%s1070 + $0x138] sm:$0xff]
        %v1111 = vld [vmem:[%s1070 + $0x140] sm:$0xff]
        %v1112 = vld [vmem:[%s1070 + $0x148] sm:$0xff]
        %v1113 = vld [vmem:[%s1070 + $0x150] sm:$0xff]
        %v1114 = vld [vmem:[%s1070 + $0x158] sm:$0xff]
        %v1115 = vld [vmem:[%s1070 + $0x160] sm:$0xff]
        %v1116 = vld [vmem:[%s1070 + $0x168] sm:$0xff]
        %v1117 = vld [vmem:[%s1070 + $0x170] sm:$0xff]
        %v1118 = vld [vmem:[%s1070 + $0x178] sm:$0xff]
        %v1119 = vld [vmem:[%s1070 + $0x180] sm:$0xff]
        %v1120 = vld [vmem:[%s1070 + $0x188] sm:$0xff]
        %v1121 = vld [vmem:[%s1070 + $0x190] sm:$0xff]
        %v1122 = vld [vmem:[%s1070 + $0x198] sm:$0xff]
        %v1123 = vld [vmem:[%s1070 + $0x1a0] sm:$0xff]
        %v1124 = vld [vmem:[%s1070 + $0x1a8] sm:$0xff]
        %v1125 = vld [vmem:[%s1070 + $0x1b0] sm:$0xff]
        %v1126 = vld [vmem:[%s1070 + $0x1b8] sm:$0xff]
        %v1127 = vld [vmem:[%s1070 + $0x1c0] sm:$0xff]
        %v1128 = vld [vmem:[%s1070 + $0x1c8] sm:$0xff]
        %v1129 = vld [vmem:[%s1070 + $0x1d0] sm:$0xff]
        %v1130 = vld [vmem:[%s1070 + $0x1d8] sm:$0xff]
        %v1131 = vld [vmem:[%s1070 + $0x1e0] sm:$0xff]
        %v1132 = vld [vmem:[%s1070 + $0x1e8] sm:$0xff]
        %v1133 = vld [vmem:[%s1070 + $0x1f0] sm:$0xff]
        %v1134 = vld [vmem:[%s1070 + $0x1f8] sm:$0xff]
        %v1135 = vld [vmem:[%s1070 + $0x200] sm:$0xff]
        %v1136 = vld [vmem:[%s1070 + $0x208] sm:$0xff]
        %v1137 = vld [vmem:[%s1070 + $0x210] sm:$0xff]
        %v1138 = vld [vmem:[%s1070 + $0x218] sm:$0xff]
        %v1139 = vld [vmem:[%s1070 + $0x220] sm:$0xff]
        %v1140 = vld [vmem:[%s1070 + $0x228] sm:$0xff]
        %v1141 = vld [vmem:[%s1070 + $0x230] sm:$0xff]
        %v1142 = vld [vmem:[%s1070 + $0x238] sm:$0xff]
        %v1143 = vld [vmem:[%s1070 + $0x240] sm:$0xff]
        %v1144 = vld [vmem:[%s1070 + $0x248] sm:$0xff]
        %v1145 = vld [vmem:[%s1070 + $0x250] sm:$0xff]
        %v1146 = vld [vmem:[%s1070 + $0x258] sm:$0xff]
        %v1147 = vld [vmem:[%s1070 + $0x260] sm:$0xff]
        %v1148 = vld [vmem:[%s1070 + $0x268] sm:$0xff]
        %v1149 = vld [vmem:[%s1070 + $0x270] sm:$0xff]
        %v1150 = vld [vmem:[%s1070 + $0x278] sm:$0xff]
        %v1151 = vld [vmem:[%s1070 + $0x280] sm:$0xff]
        %v1152 = vld [vmem:[%s1070 + $0x288] sm:$0xff]
        %v1153 = vld [vmem:[%s1070 + $0x290] sm:$0xff]
        %v1154 = vld [vmem:[%s1070 + $0x298] sm:$0xff]
        %v1155 = vld [vmem:[%s1070 + $0x2a0] sm:$0xff]
        %v1156 = vld [vmem:[%s1070 + $0x2a8] sm:$0xff]
        %v1157 = vld [vmem:[%s1070 + $0x2b0] sm:$0xff]
        %v1158 = vld [vmem:[%s1070 + $0x2b8] sm:$0xff]
        %v1159 = vld [vmem:[%s1070 + $0x2c0] sm:$0xff]
        %v1160 = vld [vmem:[%s1070 + $0x2c8] sm:$0xff]
        %v1161 = vld [vmem:[%s1070 + $0x2d0] sm:$0xff]
        %v1162 = vld [vmem:[%s1070 + $0x2d8] sm:$0xff]
        %v1163 = vld [vmem:[%s1070 + $0x2e0] sm:$0xff]
        %v1164 = vld [vmem:[%s1070 + $0x2e8] sm:$0xff]
        %v1165 = vld [vmem:[%s1070 + $0x2f0] sm:$0xff]
        %v1166 = vld [vmem:[%s1070 + $0x2f8] sm:$0xff]
        %v1167 = vld [vmem:[%s1070 + $0x300] sm:$0xff]
        %v1168 = vld [vmem:[%s1070 + $0x308] sm:$0xff]
        %v1169 = vld [vmem:[%s1070 + $0x310] sm:$0xff]
        %v1170 = vld [vmem:[%s1070 + $0x318] sm:$0xff]
        %v1171 = vld [vmem:[%s1070 + $0x320] sm:$0xff]
        %v1172 = vld [vmem:[%s1070 + $0x328] sm:$0xff]
        %v1173 = vld [vmem:[%s1070 + $0x330] sm:$0xff]
        %v1174 = vld [vmem:[%s1070 + $0x338] sm:$0xff]
        %v1175 = vld [vmem:[%s1070 + $0x340] sm:$0xff]
        %v1176 = vld [vmem:[%s1070 + $0x348] sm:$0xff]
        %v1177 = vld [vmem:[%s1070 + $0x350] sm:$0xff]
        %v1178 = vld [vmem:[%s1070 + $0x358] sm:$0xff]
        %v1179 = vld [vmem:[%s1070 + $0x360] sm:$0xff]
        %v1180 = vld [vmem:[%s1070 + $0x368] sm:$0xff]
        %v1181 = vld [vmem:[%s1070 + $0x370] sm:$0xff]
        %v1182 = vld [vmem:[%s1070 + $0x378] sm:$0xff]
        %v1183 = vld [vmem:[%s1070 + $0x380] sm:$0xff]
        %v1184 = vld [vmem:[%s1070 + $0x388] sm:$0xff]
        %v1185 = vld [vmem:[%s1070 + $0x390] sm:$0xff]
        %v1186 = vld [vmem:[%s1070 + $0x398] sm:$0xff]
        %v1187 = vld [vmem:[%s1070 + $0x3a0] sm:$0xff]
        %v1188 = vld [vmem:[%s1070 + $0x3a8] sm:$0xff]
        %v1189 = vld [vmem:[%s1070 + $0x3b0] sm:$0xff]
        %v1190 = vld [vmem:[%s1070 + $0x3b8] sm:$0xff]
        %v1191 = vld [vmem:[%s1070 + $0x3c0] sm:$0xff]
        %v1192 = vld [vmem:[%s1070 + $0x3c8] sm:$0xff]
        %v1193 = vld [vmem:[%s1070 + $0x3d0] sm:$0xff]
        %v1194 = vld [vmem:[%s1070 + $0x3d8] sm:$0xff]
        %v1195 = vld [vmem:[%s1070 + $0x3e0] sm:$0xff]
        %v1196 = vld [vmem:[%s1070 + $0x3e8] sm:$0xff]
        %v1197 = vld [vmem:[%s1070 + $0x3f0] sm:$0xff]
        %v1198 = vld [vmem:[%s1070 + $0x3f8] sm:$0xff]
        %v1199 = vunpack.c.l.bf16 %v1071
        %v1200 = vunpack.c.h.bf16 %v1071
        %v1201 = vunpack.c.l.bf16 %v1072
        %v1202 = vunpack.c.h.bf16 %v1072
        %v1203 = vunpack.c.l.bf16 %v1073
        %v1204 = vunpack.c.h.bf16 %v1073
        %v1205 = vunpack.c.l.bf16 %v1074
        %v1206 = vunpack.c.h.bf16 %v1074
        %v1207 = vunpack.c.l.bf16 %v1075
        %v1208 = vunpack.c.h.bf16 %v1075
        %v1209 = vunpack.c.l.bf16 %v1076
        %v1210 = vunpack.c.h.bf16 %v1076
        %v1211 = vunpack.c.l.bf16 %v1077
        %v1212 = vunpack.c.h.bf16 %v1077
        %v1213 = vunpack.c.l.bf16 %v1078
        %v1214 = vunpack.c.h.bf16 %v1078
        %v1215 = vunpack.c.l.bf16 %v1079
        %v1216 = vunpack.c.h.bf16 %v1079
        %v1217 = vunpack.c.l.bf16 %v1080
        %v1218 = vunpack.c.h.bf16 %v1080
        %v1219 = vunpack.c.l.bf16 %v1081
        %v1220 = vunpack.c.h.bf16 %v1081
        %v1221 = vunpack.c.l.bf16 %v1082
        %v1222 = vunpack.c.h.bf16 %v1082
        %v1223 = vunpack.c.l.bf16 %v1083
        %v1224 = vunpack.c.h.bf16 %v1083
        %v1225 = vunpack.c.l.bf16 %v1084
        %v1226 = vunpack.c.h.bf16 %v1084
        %v1227 = vunpack.c.l.bf16 %v1085
        %v1228 = vunpack.c.h.bf16 %v1085
        %v1229 = vunpack.c.l.bf16 %v1086
        %v1230 = vunpack.c.h.bf16 %v1086
        %v1231 = vunpack.c.l.bf16 %v1087
        %v1232 = vunpack.c.h.bf16 %v1087
        %v1233 = vunpack.c.l.bf16 %v1088
        %v1234 = vunpack.c.h.bf16 %v1088
        %v1235 = vunpack.c.l.bf16 %v1089
        %v1236 = vunpack.c.h.bf16 %v1089
        %v1237 = vunpack.c.l.bf16 %v1090
        %v1238 = vunpack.c.h.bf16 %v1090
        %v1239 = vunpack.c.l.bf16 %v1091
        %v1240 = vunpack.c.h.bf16 %v1091
        %v1241 = vunpack.c.l.bf16 %v1092
        %v1242 = vunpack.c.h.bf16 %v1092
        %v1243 = vunpack.c.l.bf16 %v1093
        %v1244 = vunpack.c.h.bf16 %v1093
        %v1245 = vunpack.c.l.bf16 %v1094
        %v1246 = vunpack.c.h.bf16 %v1094
        %v1247 = vunpack.c.l.bf16 %v1095
        %v1248 = vunpack.c.h.bf16 %v1095
        %v1249 = vunpack.c.l.bf16 %v1096
        %v1250 = vunpack.c.h.bf16 %v1096
        %v1251 = vunpack.c.l.bf16 %v1097
        %v1252 = vunpack.c.h.bf16 %v1097
        %v1253 = vunpack.c.l.bf16 %v1098
        %v1254 = vunpack.c.h.bf16 %v1098
        %v1255 = vunpack.c.l.bf16 %v1099
        %v1256 = vunpack.c.h.bf16 %v1099
        %v1257 = vunpack.c.l.bf16 %v1100
        %v1258 = vunpack.c.h.bf16 %v1100
        %v1259 = vunpack.c.l.bf16 %v1101
        %v1260 = vunpack.c.h.bf16 %v1101
        %v1261 = vunpack.c.l.bf16 %v1102
        %v1262 = vunpack.c.h.bf16 %v1102
        %v1263 = vunpack.c.l.bf16 %v1103
        %v1264 = vunpack.c.h.bf16 %v1103
        %v1265 = vunpack.c.l.bf16 %v1104
        %v1266 = vunpack.c.h.bf16 %v1104
        %v1267 = vunpack.c.l.bf16 %v1105
        %v1268 = vunpack.c.h.bf16 %v1105
        %v1269 = vunpack.c.l.bf16 %v1106
        %v1270 = vunpack.c.h.bf16 %v1106
        %v1271 = vunpack.c.l.bf16 %v1107
        %v1272 = vunpack.c.h.bf16 %v1107
        %v1273 = vunpack.c.l.bf16 %v1108
        %v1274 = vunpack.c.h.bf16 %v1108
        %v1275 = vunpack.c.l.bf16 %v1109
        %v1276 = vunpack.c.h.bf16 %v1109
        %v1277 = vunpack.c.l.bf16 %v1110
        %v1278 = vunpack.c.h.bf16 %v1110
        %v1279 = vunpack.c.l.bf16 %v1111
        %v1280 = vunpack.c.h.bf16 %v1111
        %v1281 = vunpack.c.l.bf16 %v1112
        %v1282 = vunpack.c.h.bf16 %v1112
        %v1283 = vunpack.c.l.bf16 %v1113
        %v1284 = vunpack.c.h.bf16 %v1113
        %v1285 = vunpack.c.l.bf16 %v1114
        %v1286 = vunpack.c.h.bf16 %v1114
        %v1287 = vunpack.c.l.bf16 %v1115
        %v1288 = vunpack.c.h.bf16 %v1115
        %v1289 = vunpack.c.l.bf16 %v1116
        %v1290 = vunpack.c.h.bf16 %v1116
        %v1291 = vunpack.c.l.bf16 %v1117
        %v1292 = vunpack.c.h.bf16 %v1117
        %v1293 = vunpack.c.l.bf16 %v1118
        %v1294 = vunpack.c.h.bf16 %v1118
        %v1295 = vunpack.c.l.bf16 %v1119
        %v1296 = vunpack.c.h.bf16 %v1119
        %v1297 = vunpack.c.l.bf16 %v1120
        %v1298 = vunpack.c.h.bf16 %v1120
        %v1299 = vunpack.c.l.bf16 %v1121
        %v1300 = vunpack.c.h.bf16 %v1121
        %v1301 = vunpack.c.l.bf16 %v1122
        %v1302 = vunpack.c.h.bf16 %v1122
        %v1303 = vunpack.c.l.bf16 %v1123
        %v1304 = vunpack.c.h.bf16 %v1123
        %v1305 = vunpack.c.l.bf16 %v1124
        %v1306 = vunpack.c.h.bf16 %v1124
        %v1307 = vunpack.c.l.bf16 %v1125
        %v1308 = vunpack.c.h.bf16 %v1125
        %v1309 = vunpack.c.l.bf16 %v1126
        %v1310 = vunpack.c.h.bf16 %v1126
        %v1311 = vunpack.c.l.bf16 %v1127
        %v1312 = vunpack.c.h.bf16 %v1127
        %v1313 = vunpack.c.l.bf16 %v1128
        %v1314 = vunpack.c.h.bf16 %v1128
        %v1315 = vunpack.c.l.bf16 %v1129
        %v1316 = vunpack.c.h.bf16 %v1129
        %v1317 = vunpack.c.l.bf16 %v1130
        %v1318 = vunpack.c.h.bf16 %v1130
        %v1319 = vunpack.c.l.bf16 %v1131
        %v1320 = vunpack.c.h.bf16 %v1131
        %v1321 = vunpack.c.l.bf16 %v1132
        %v1322 = vunpack.c.h.bf16 %v1132
        %v1323 = vunpack.c.l.bf16 %v1133
        %v1324 = vunpack.c.h.bf16 %v1133
        %v1325 = vunpack.c.l.bf16 %v1134
        %v1326 = vunpack.c.h.bf16 %v1134
        %v1327 = vunpack.c.l.bf16 %v1135
        %v1328 = vunpack.c.h.bf16 %v1135
        %v1329 = vunpack.c.l.bf16 %v1136
        %v1330 = vunpack.c.h.bf16 %v1136
        %v1331 = vunpack.c.l.bf16 %v1137
        %v1332 = vunpack.c.h.bf16 %v1137
        %v1333 = vunpack.c.l.bf16 %v1138
        %v1334 = vunpack.c.h.bf16 %v1138
        %v1335 = vunpack.c.l.bf16 %v1139
        %v1336 = vunpack.c.h.bf16 %v1139
        %v1337 = vunpack.c.l.bf16 %v1140
        %v1338 = vunpack.c.h.bf16 %v1140
        %v1339 = vunpack.c.l.bf16 %v1141
        %v1340 = vunpack.c.h.bf16 %v1141
        %v1341 = vunpack.c.l.bf16 %v1142
        %v1342 = vunpack.c.h.bf16 %v1142
        %v1343 = vunpack.c.l.bf16 %v1143
        %v1344 = vunpack.c.h.bf16 %v1143
        %v1345 = vunpack.c.l.bf16 %v1144
        %v1346 = vunpack.c.h.bf16 %v1144
        %v1347 = vunpack.c.l.bf16 %v1145
        %v1348 = vunpack.c.h.bf16 %v1145
        %v1349 = vunpack.c.l.bf16 %v1146
        %v1350 = vunpack.c.h.bf16 %v1146
        %v1351 = vunpack.c.l.bf16 %v1147
        %v1352 = vunpack.c.h.bf16 %v1147
        %v1353 = vunpack.c.l.bf16 %v1148
        %v1354 = vunpack.c.h.bf16 %v1148
        %v1355 = vunpack.c.l.bf16 %v1149
        %v1356 = vunpack.c.h.bf16 %v1149
        %v1357 = vunpack.c.l.bf16 %v1150
        %v1358 = vunpack.c.h.bf16 %v1150
        %v1359 = vunpack.c.l.bf16 %v1151
        %v1360 = vunpack.c.h.bf16 %v1151
        %v1361 = vunpack.c.l.bf16 %v1152
        %v1362 = vunpack.c.h.bf16 %v1152
        %v1363 = vunpack.c.l.bf16 %v1153
        %v1364 = vunpack.c.h.bf16 %v1153
        %v1365 = vunpack.c.l.bf16 %v1154
        %v1366 = vunpack.c.h.bf16 %v1154
        %v1367 = vunpack.c.l.bf16 %v1155
        %v1368 = vunpack.c.h.bf16 %v1155
        %v1369 = vunpack.c.l.bf16 %v1156
        %v1370 = vunpack.c.h.bf16 %v1156
        %v1371 = vunpack.c.l.bf16 %v1157
        %v1372 = vunpack.c.h.bf16 %v1157
        %v1373 = vunpack.c.l.bf16 %v1158
        %v1374 = vunpack.c.h.bf16 %v1158
        %v1375 = vunpack.c.l.bf16 %v1159
        %v1376 = vunpack.c.h.bf16 %v1159
        %v1377 = vunpack.c.l.bf16 %v1160
        %v1378 = vunpack.c.h.bf16 %v1160
        %v1379 = vunpack.c.l.bf16 %v1161
        %v1380 = vunpack.c.h.bf16 %v1161
        %v1381 = vunpack.c.l.bf16 %v1162
        %v1382 = vunpack.c.h.bf16 %v1162
        %v1383 = vunpack.c.l.bf16 %v1163
        %v1384 = vunpack.c.h.bf16 %v1163
        %v1385 = vunpack.c.l.bf16 %v1164
        %v1386 = vunpack.c.h.bf16 %v1164
        %v1387 = vunpack.c.l.bf16 %v1165
        %v1388 = vunpack.c.h.bf16 %v1165
        %v1389 = vunpack.c.l.bf16 %v1166
        %v1390 = vunpack.c.h.bf16 %v1166
        %v1391 = vunpack.c.l.bf16 %v1167
        %v1392 = vunpack.c.h.bf16 %v1167
        %v1393 = vunpack.c.l.bf16 %v1168
        %v1394 = vunpack.c.h.bf16 %v1168
        %v1395 = vunpack.c.l.bf16 %v1169
        %v1396 = vunpack.c.h.bf16 %v1169
        %v1397 = vunpack.c.l.bf16 %v1170
        %v1398 = vunpack.c.h.bf16 %v1170
        %v1399 = vunpack.c.l.bf16 %v1171
        %v1400 = vunpack.c.h.bf16 %v1171
        %v1401 = vunpack.c.l.bf16 %v1172
        %v1402 = vunpack.c.h.bf16 %v1172
        %v1403 = vunpack.c.l.bf16 %v1173
        %v1404 = vunpack.c.h.bf16 %v1173
        %v1405 = vunpack.c.l.bf16 %v1174
        %v1406 = vunpack.c.h.bf16 %v1174
        %v1407 = vunpack.c.l.bf16 %v1175
        %v1408 = vunpack.c.h.bf16 %v1175
        %v1409 = vunpack.c.l.bf16 %v1176
        %v1410 = vunpack.c.h.bf16 %v1176
        %v1411 = vunpack.c.l.bf16 %v1177
        %v1412 = vunpack.c.h.bf16 %v1177
        %v1413 = vunpack.c.l.bf16 %v1178
        %v1414 = vunpack.c.h.bf16 %v1178
        %v1415 = vunpack.c.l.bf16 %v1179
        %v1416 = vunpack.c.h.bf16 %v1179
        %v1417 = vunpack.c.l.bf16 %v1180
        %v1418 = vunpack.c.h.bf16 %v1180
        %v1419 = vunpack.c.l.bf16 %v1181
        %v1420 = vunpack.c.h.bf16 %v1181
        %v1421 = vunpack.c.l.bf16 %v1182
        %v1422 = vunpack.c.h.bf16 %v1182
        %v1423 = vunpack.c.l.bf16 %v1183
        %v1424 = vunpack.c.h.bf16 %v1183
        %v1425 = vunpack.c.l.bf16 %v1184
        %v1426 = vunpack.c.h.bf16 %v1184
        %v1427 = vunpack.c.l.bf16 %v1185
        %v1428 = vunpack.c.h.bf16 %v1185
        %v1429 = vunpack.c.l.bf16 %v1186
        %v1430 = vunpack.c.h.bf16 %v1186
        %v1431 = vunpack.c.l.bf16 %v1187
        %v1432 = vunpack.c.h.bf16 %v1187
        %v1433 = vunpack.c.l.bf16 %v1188
        %v1434 = vunpack.c.h.bf16 %v1188
        %v1435 = vunpack.c.l.bf16 %v1189
        %v1436 = vunpack.c.h.bf16 %v1189
        %v1437 = vunpack.c.l.bf16 %v1190
        %v1438 = vunpack.c.h.bf16 %v1190
        %v1439 = vunpack.c.l.bf16 %v1191
        %v1440 = vunpack.c.h.bf16 %v1191
        %v1441 = vunpack.c.l.bf16 %v1192
        %v1442 = vunpack.c.h.bf16 %v1192
        %v1443 = vunpack.c.l.bf16 %v1193
        %v1444 = vunpack.c.h.bf16 %v1193
        %v1445 = vunpack.c.l.bf16 %v1194
        %v1446 = vunpack.c.h.bf16 %v1194
        %v1447 = vunpack.c.l.bf16 %v1195
        %v1448 = vunpack.c.h.bf16 %v1195
        %v1449 = vunpack.c.l.bf16 %v1196
        %v1450 = vunpack.c.h.bf16 %v1196
        %v1451 = vunpack.c.l.bf16 %v1197
        %v1452 = vunpack.c.h.bf16 %v1197
        %v1453 = vunpack.c.l.bf16 %v1198
        %v1454 = vunpack.c.h.bf16 %v1198
        %s1455 = scalar_lea.vmem %s253, 4 [#allocation8]
        %v1456 = vld [vmem:[%s1455] sm:$0xf]
        %v1458 = vlaneseq
        %v1459 = vshrl.u32 %v1458, 7
        %v1460 = vsub.s32 0, %v1459
        %v1461 = vrot.slane %v1456, %v1460
        %v1462 = vlaneseq
        %v1463 = vshrl.u32 %v1462, 7
        %v1464 = vsub.s32 1, %v1463
        %v1465 = vrot.slane %v1456, %v1464
        %v1466 = vlaneseq
        %v1467 = vshrl.u32 %v1466, 7
        %v1468 = vsub.s32 2, %v1467
        %v1469 = vrot.slane %v1456, %v1468
        %v1470 = vlaneseq
        %v1471 = vshrl.u32 %v1470, 7
        %v1472 = vsub.s32 3, %v1471
        %v1473 = vrot.slane %v1456, %v1472
        %1478 = vmatprep.subr.mxu0 %v1200
        %1479 = vmatpush1.msra.mxu0 %v1199
        %1480 = vmatprep.subr.mxu0 %v1204
        %1481 = vmatpush1.msra.mxu0 %v1203
        %1482 = vmatprep.subr.mxu0 %v1208
        %1483 = vmatpush1.msra.mxu0 %v1207
        %1484 = vmatprep.subr.mxu0 %v1212
        %1485 = vmatpush1.msra.mxu0 %v1211
        %1486 = vmatprep.subr.mxu0 %v1216
        %1487 = vmatpush1.msra.mxu0 %v1215
        %1488 = vmatprep.subr.mxu0 %v1220
        %1489 = vmatpush1.msra.mxu0 %v1219
        %1490 = vmatprep.subr.mxu0 %v1224
        %1491 = vmatpush1.msra.mxu0 %v1223
        %1492 = vmatprep.subr.mxu0 %v1228
        %1493 = vmatpush1.msra.mxu0 %v1227
        %1494 = vmatprep.subr.mxu0 %v1232
        %1495 = vmatpush1.msra.mxu0 %v1231
        %1496 = vmatprep.subr.mxu0 %v1236
        %1497 = vmatpush1.msra.mxu0 %v1235
        %1498 = vmatprep.subr.mxu0 %v1240
        %1499 = vmatpush1.msra.mxu0 %v1239
        %1500 = vmatprep.subr.mxu0 %v1244
        %1501 = vmatpush1.msra.mxu0 %v1243
        %1502 = vmatprep.subr.mxu0 %v1248
        %1503 = vmatpush1.msra.mxu0 %v1247
        %1504 = vmatprep.subr.mxu0 %v1252
        %1505 = vmatpush1.msra.mxu0 %v1251
        %1506 = vmatprep.subr.mxu0 %v1256
        %1507 = vmatpush1.msra.mxu0 %v1255
        %1508 = vmatprep.subr.mxu0 %v1260
        %1509 = vmatpush1.msra.mxu0 %v1259
        %1510 = vmatprep.subr.mxu0 %v1264
        %1511 = vmatpush1.msra.mxu0 %v1263
        %1512 = vmatprep.subr.mxu0 %v1268
        %1513 = vmatpush1.msra.mxu0 %v1267
        %1514 = vmatprep.subr.mxu0 %v1272
        %1515 = vmatpush1.msra.mxu0 %v1271
        %1516 = vmatprep.subr.mxu0 %v1276
        %1517 = vmatpush1.msra.mxu0 %v1275
        %1518 = vmatprep.subr.mxu0 %v1280
        %1519 = vmatpush1.msra.mxu0 %v1279
        %1520 = vmatprep.subr.mxu0 %v1284
        %1521 = vmatpush1.msra.mxu0 %v1283
        %1522 = vmatprep.subr.mxu0 %v1288
        %1523 = vmatpush1.msra.mxu0 %v1287
        %1524 = vmatprep.subr.mxu0 %v1292
        %1525 = vmatpush1.msra.mxu0 %v1291
        %1526 = vmatprep.subr.mxu0 %v1296
        %1527 = vmatpush1.msra.mxu0 %v1295
        %1528 = vmatprep.subr.mxu0 %v1300
        %1529 = vmatpush1.msra.mxu0 %v1299
        %1530 = vmatprep.subr.mxu0 %v1304
        %1531 = vmatpush1.msra.mxu0 %v1303
        %1532 = vmatprep.subr.mxu0 %v1308
        %1533 = vmatpush1.msra.mxu0 %v1307
        %1534 = vmatprep.subr.mxu0 %v1312
        %1535 = vmatpush1.msra.mxu0 %v1311
        %1536 = vmatprep.subr.mxu0 %v1316
        %1537 = vmatpush1.msra.mxu0 %v1315
        %1538 = vmatprep.subr.mxu0 %v1320
        %1539 = vmatpush1.msra.mxu0 %v1319
        %1540 = vmatprep.subr.mxu0 %v1324
        %1541 = vmatpush1.msra.mxu0 %v1323
        %1542 = vmatprep.mubr.f32.mxu0 %v1067
        %1543 = vmatmul.mubr.f32.gmra.mrb[0].mxu0 %v1066
        %v1544 = vpop.f32.mrb[0].mxu0
        %v1545 = vadd.f32 %v1461, %v1544
        %v1546 = vpop.f32.mrb[0].mxu0
        %v1547 = vadd.f32 %v1465, %v1546
        %1548 = vdwg.mxu0
        %1549 = vmatprep.subr.mxu0 %v1328
        %1550 = vmatpush1.msra.mxu0 %v1327
        %1551 = vmatprep.subr.mxu0 %v1332
        %1552 = vmatpush1.msra.mxu0 %v1331
        %1553 = vmatprep.subr.mxu0 %v1336
        %1554 = vmatpush1.msra.mxu0 %v1335
        %1555 = vmatprep.subr.mxu0 %v1340
        %1556 = vmatpush1.msra.mxu0 %v1339
        %1557 = vmatprep.subr.mxu0 %v1344
        %1558 = vmatpush1.msra.mxu0 %v1343
        %1559 = vmatprep.subr.mxu0 %v1348
        %1560 = vmatpush1.msra.mxu0 %v1347
        %1561 = vmatprep.subr.mxu0 %v1352
        %1562 = vmatpush1.msra.mxu0 %v1351
        %1563 = vmatprep.subr.mxu0 %v1356
        %1564 = vmatpush1.msra.mxu0 %v1355
        %1565 = vmatprep.subr.mxu0 %v1360
        %1566 = vmatpush1.msra.mxu0 %v1359
        %1567 = vmatprep.subr.mxu0 %v1364
        %1568 = vmatpush1.msra.mxu0 %v1363
        %1569 = vmatprep.subr.mxu0 %v1368
        %1570 = vmatpush1.msra.mxu0 %v1367
        %1571 = vmatprep.subr.mxu0 %v1372
        %1572 = vmatpush1.msra.mxu0 %v1371
        %1573 = vmatprep.subr.mxu0 %v1376
        %1574 = vmatpush1.msra.mxu0 %v1375
        %1575 = vmatprep.subr.mxu0 %v1380
        %1576 = vmatpush1.msra.mxu0 %v1379
        %1577 = vmatprep.subr.mxu0 %v1384
        %1578 = vmatpush1.msra.mxu0 %v1383
        %1579 = vmatprep.subr.mxu0 %v1388
        %1580 = vmatpush1.msra.mxu0 %v1387
        %1581 = vmatprep.subr.mxu0 %v1392
        %1582 = vmatpush1.msra.mxu0 %v1391
        %1583 = vmatprep.subr.mxu0 %v1396
        %1584 = vmatpush1.msra.mxu0 %v1395
        %1585 = vmatprep.subr.mxu0 %v1400
        %1586 = vmatpush1.msra.mxu0 %v1399
        %1587 = vmatprep.subr.mxu0 %v1404
        %1588 = vmatpush1.msra.mxu0 %v1403
        %1589 = vmatprep.subr.mxu0 %v1408
        %1590 = vmatpush1.msra.mxu0 %v1407
        %1591 = vmatprep.subr.mxu0 %v1412
        %1592 = vmatpush1.msra.mxu0 %v1411
        %1593 = vmatprep.subr.mxu0 %v1416
        %1594 = vmatpush1.msra.mxu0 %v1415
        %1595 = vmatprep.subr.mxu0 %v1420
        %1596 = vmatpush1.msra.mxu0 %v1419
        %1597 = vmatprep.subr.mxu0 %v1424
        %1598 = vmatpush1.msra.mxu0 %v1423
        %1599 = vmatprep.subr.mxu0 %v1428
        %1600 = vmatpush1.msra.mxu0 %v1427
        %1601 = vmatprep.subr.mxu0 %v1432
        %1602 = vmatpush1.msra.mxu0 %v1431
        %1603 = vmatprep.subr.mxu0 %v1436
        %1604 = vmatpush1.msra.mxu0 %v1435
        %1605 = vmatprep.subr.mxu0 %v1440
        %1606 = vmatpush1.msra.mxu0 %v1439
        %1607 = vmatprep.subr.mxu0 %v1444
        %1608 = vmatpush1.msra.mxu0 %v1443
        %1609 = vmatprep.subr.mxu0 %v1448
        %1610 = vmatpush1.msra.mxu0 %v1447
        %1611 = vmatprep.subr.mxu0 %v1452
        %1612 = vmatpush1.msra.mxu0 %v1451
        %1613 = vmatprep.mubr.f32.mxu0 %v1069
        %1614 = vmatmul.mubr.f32.gmra.mrb[0].mxu0 %v1068
        %v1615 = vpop.f32.mrb[0].mxu0
        %v1616 = vadd.f32 %v1545, %v1615
        %v1617 = vpop.f32.mrb[0].mxu0
        %v1618 = vadd.f32 %v1547, %v1617
        %1619 = vdwg.mxu0
        %1620 = vmatprep.subr.mxu0 %v1202
        %1621 = vmatpush1.msra.mxu0 %v1201
        %1622 = vmatprep.subr.mxu0 %v1206
        %1623 = vmatpush1.msra.mxu0 %v1205
        %1624 = vmatprep.subr.mxu0 %v1210
        %1625 = vmatpush1.msra.mxu0 %v1209
        %1626 = vmatprep.subr.mxu0 %v1214
        %1627 = vmatpush1.msra.mxu0 %v1213
        %1628 = vmatprep.subr.mxu0 %v1218
        %1629 = vmatpush1.msra.mxu0 %v1217
        %1630 = vmatprep.subr.mxu0 %v1222
        %1631 = vmatpush1.msra.mxu0 %v1221
        %1632 = vmatprep.subr.mxu0 %v1226
        %1633 = vmatpush1.msra.mxu0 %v1225
        %1634 = vmatprep.subr.mxu0 %v1230
        %1635 = vmatpush1.msra.mxu0 %v1229
        %1636 = vmatprep.subr.mxu0 %v1234
        %1637 = vmatpush1.msra.mxu0 %v1233
        %1638 = vmatprep.subr.mxu0 %v1238
        %1639 = vmatpush1.msra.mxu0 %v1237
        %1640 = vmatprep.subr.mxu0 %v1242
        %1641 = vmatpush1.msra.mxu0 %v1241
        %1642 = vmatprep.subr.mxu0 %v1246
        %1643 = vmatpush1.msra.mxu0 %v1245
        %1644 = vmatprep.subr.mxu0 %v1250
        %1645 = vmatpush1.msra.mxu0 %v1249
        %1646 = vmatprep.subr.mxu0 %v1254
        %1647 = vmatpush1.msra.mxu0 %v1253
        %1648 = vmatprep.subr.mxu0 %v1258
        %1649 = vmatpush1.msra.mxu0 %v1257
        %1650 = vmatprep.subr.mxu0 %v1262
        %1651 = vmatpush1.msra.mxu0 %v1261
        %1652 = vmatprep.subr.mxu0 %v1266
        %1653 = vmatpush1.msra.mxu0 %v1265
        %1654 = vmatprep.subr.mxu0 %v1270
        %1655 = vmatpush1.msra.mxu0 %v1269
        %1656 = vmatprep.subr.mxu0 %v1274
        %1657 = vmatpush1.msra.mxu0 %v1273
        %1658 = vmatprep.subr.mxu0 %v1278
        %1659 = vmatpush1.msra.mxu0 %v1277
        %1660 = vmatprep.subr.mxu0 %v1282
        %1661 = vmatpush1.msra.mxu0 %v1281
        %1662 = vmatprep.subr.mxu0 %v1286
        %1663 = vmatpush1.msra.mxu0 %v1285
        %1664 = vmatprep.subr.mxu0 %v1290
        %1665 = vmatpush1.msra.mxu0 %v1289
        %1666 = vmatprep.subr.mxu0 %v1294
        %1667 = vmatpush1.msra.mxu0 %v1293
        %1668 = vmatprep.subr.mxu0 %v1298
        %1669 = vmatpush1.msra.mxu0 %v1297
        %1670 = vmatprep.subr.mxu0 %v1302
        %1671 = vmatpush1.msra.mxu0 %v1301
        %1672 = vmatprep.subr.mxu0 %v1306
        %1673 = vmatpush1.msra.mxu0 %v1305
        %1674 = vmatprep.subr.mxu0 %v1310
        %1675 = vmatpush1.msra.mxu0 %v1309
        %1676 = vmatprep.subr.mxu0 %v1314
        %1677 = vmatpush1.msra.mxu0 %v1313
        %1678 = vmatprep.subr.mxu0 %v1318
        %1679 = vmatpush1.msra.mxu0 %v1317
        %1680 = vmatprep.subr.mxu0 %v1322
        %1681 = vmatpush1.msra.mxu0 %v1321
        %1682 = vmatprep.subr.mxu0 %v1326
        %1683 = vmatpush1.msra.mxu0 %v1325
        %1684 = vmatprep.mubr.f32.mxu0 %v1067
        %1685 = vmatmul.mubr.f32.gmra.mrb[0].mxu0 %v1066
        %v1686 = vpop.f32.mrb[0].mxu0
        %v1687 = vadd.f32 %v1469, %v1686
        %v1688 = vpop.f32.mrb[0].mxu0
        %v1689 = vadd.f32 %v1473, %v1688
        %1690 = vdwg.mxu0
        %1691 = vmatprep.subr.mxu0 %v1330
        %1692 = vmatpush1.msra.mxu0 %v1329
        %1693 = vmatprep.subr.mxu0 %v1334
        %1694 = vmatpush1.msra.mxu0 %v1333
        %1695 = vmatprep.subr.mxu0 %v1338
        %1696 = vmatpush1.msra.mxu0 %v1337
        %1697 = vmatprep.subr.mxu0 %v1342
        %1698 = vmatpush1.msra.mxu0 %v1341
        %1699 = vmatprep.subr.mxu0 %v1346
        %1700 = vmatpush1.msra.mxu0 %v1345
        %1701 = vmatprep.subr.mxu0 %v1350
        %1702 = vmatpush1.msra.mxu0 %v1349
        %1703 = vmatprep.subr.mxu0 %v1354
        %1704 = vmatpush1.msra.mxu0 %v1353
        %1705 = vmatprep.subr.mxu0 %v1358
        %1706 = vmatpush1.msra.mxu0 %v1357
        %1707 = vmatprep.subr.mxu0 %v1362
        %1708 = vmatpush1.msra.mxu0 %v1361
        %1709 = vmatprep.subr.mxu0 %v1366
        %1710 = vmatpush1.msra.mxu0 %v1365
        %1711 = vmatprep.subr.mxu0 %v1370
        %1712 = vmatpush1.msra.mxu0 %v1369
        %1713 = vmatprep.subr.mxu0 %v1374
        %1714 = vmatpush1.msra.mxu0 %v1373
        %1715 = vmatprep.subr.mxu0 %v1378
        %1716 = vmatpush1.msra.mxu0 %v1377
        %1717 = vmatprep.subr.mxu0 %v1382
        %1718 = vmatpush1.msra.mxu0 %v1381
        %1719 = vmatprep.subr.mxu0 %v1386
        %1720 = vmatpush1.msra.mxu0 %v1385
        %1721 = vmatprep.subr.mxu0 %v1390
        %1722 = vmatpush1.msra.mxu0 %v1389
        %1723 = vmatprep.subr.mxu0 %v1394
        %1724 = vmatpush1.msra.mxu0 %v1393
        %1725 = vmatprep.subr.mxu0 %v1398
        %1726 = vmatpush1.msra.mxu0 %v1397
        %1727 = vmatprep.subr.mxu0 %v1402
        %1728 = vmatpush1.msra.mxu0 %v1401
        %1729 = vmatprep.subr.mxu0 %v1406
        %1730 = vmatpush1.msra.mxu0 %v1405
        %1731 = vmatprep.subr.mxu0 %v1410
        %1732 = vmatpush1.msra.mxu0 %v1409
        %1733 = vmatprep.subr.mxu0 %v1414
        %1734 = vmatpush1.msra.mxu0 %v1413
        %1735 = vmatprep.subr.mxu0 %v1418
        %1736 = vmatpush1.msra.mxu0 %v1417
        %1737 = vmatprep.subr.mxu0 %v1422
        %1738 = vmatpush1.msra.mxu0 %v1421
        %1739 = vmatprep.subr.mxu0 %v1426
        %1740 = vmatpush1.msra.mxu0 %v1425
        %1741 = vmatprep.subr.mxu0 %v1430
        %1742 = vmatpush1.msra.mxu0 %v1429
        %1743 = vmatprep.subr.mxu0 %v1434
        %1744 = vmatpush1.msra.mxu0 %v1433
        %1745 = vmatprep.subr.mxu0 %v1438
        %1746 = vmatpush1.msra.mxu0 %v1437
        %1747 = vmatprep.subr.mxu0 %v1442
        %1748 = vmatpush1.msra.mxu0 %v1441
        %1749 = vmatprep.subr.mxu0 %v1446
        %1750 = vmatpush1.msra.mxu0 %v1445
        %1751 = vmatprep.subr.mxu0 %v1450
        %1752 = vmatpush1.msra.mxu0 %v1449
        %1753 = vmatprep.subr.mxu0 %v1454
        %1754 = vmatpush1.msra.mxu0 %v1453
        %1755 = vmatprep.mubr.f32.mxu0 %v1069
        %1756 = vmatmul.mubr.f32.gmra.mrb[0].mxu0 %v1068
        %v1757 = vpop.f32.mrb[0].mxu0
        %v1758 = vadd.f32 %v1687, %v1757
        %v1759 = vpop.f32.mrb[0].mxu0
        %v1760 = vadd.f32 %v1689, %v1759
        %1761 = vdwg.mxu0
        %vm1762 = vcmp.ge.f32.partialorder %v1616, 0.0
        %vm1763 = vcmp.ge.f32.partialorder %v1618, 0.0
        %vm1764 = vcmp.ge.f32.partialorder %v1758, 0.0
        %vm1765 = vcmp.ge.f32.partialorder %v1760, 0.0
        %v1766 = vmul.f32 %v1616, 0.2
        %v1767 = vmul.f32 %v1618, 0.2
        %v1768 = vmul.f32 %v1758, 0.2
        %v1769 = vmul.f32 %v1760, 0.2
        %v1770 = vsel %vm1762, %v1616, %v1766
        %v1771 = vsel %vm1763, %v1618, %v1767
        %v1772 = vsel %vm1764, %v1758, %v1768
        %v1773 = vsel %vm1765, %v1760, %v1769
        %v1774 = vmul.f32 %v1770, 1.4142135
        %v1775 = vmul.f32 %v1771, 1.4142135
        %v1776 = vmul.f32 %v1772, 1.4142135
        %v1777 = vmul.f32 %v1773, 1.4142135
        %v1778 = vadd.f32 %v1774, %v756
        %v1779 = vadd.f32 %v1775, %v764
        %v1780 = vadd.f32 %v1776, %v763
        %v1781 = vadd.f32 %v1777, %v765
        %v1786 = vcombine.low %v1778, %v1779
        %v1787 = vcombine.low %v1780, %v1781
        %v1789 = vunpack.c.l.s4 1983009808
        %v1790 = vunpack.c.0.s8 %v1789
        %v1791 = vlaneseq
        %v1792 = vshrl.u32 %v1791, 7
        %v1793 = vsub.s32 %v1790, %v1792
        %v1794 = vrot.slane %v1786, %v1793
        %v1796 = vunpack.c.l.s4 1983009808
        %v1797 = vunpack.c.0.s8 %v1796
        %v1798 = vlaneseq
        %v1799 = vshrl.u32 %v1798, 7
        %v1800 = vsub.s32 %v1797, %v1799
        %v1801 = vrot.slane %v1787, %v1800
        %v1802 = vcombine.low %v1794, %v1801
        %1804 = vst [vmem:[#allocation2] sm:$0xff] %v1802
        %p1805 = scmp.eq.s32.totalorder %s28, 5
        // Predicated region
        $region49: #{tpu_custom_call.1} parent=31 // pred_check
          %p1806 = pneg %p1805
        $region50: #{tpu_custom_call.1} parent=31 // pred_check_branch
          %1808 = sbr.rel (%p1806) target = $region52
        $region51: #{tpu_custom_call.1} parent=31 // pred_region
          %v1809 = vld [vmem:[#allocation2] sm:$0xff]
          %1810 = vst [vmem:[%s285] sm:$0xff] %v1809
        $region52: #{tpu_custom_call.1} parent=31 // pred_fallthru
          _
        %s1811 = sand.u32 %s125, 1
        %s1812 = scalar_lea.sflag [#allocation5], %s1811
        %s1813 = sand.u32 %s125, 1
        %s1814 = smul.addr %s1813, 8
        %s1815 = scalar_lea.vmem [#allocation9], %s1814
        // Predicated region
        $region53: #{tpu_custom_call.1} parent=31 // pred_check
          %p1816 = pneg %p135
        $region54: #{tpu_custom_call.1} parent=31 // pred_check_branch
          %1818 = sbr.rel (%p1816) target = $region56
        $region55: #{tpu_custom_call.1} parent=31 // pred_region
          %s1820 = ssub.s32 128, 128
          %1821 = vsyncadd %s1812, %s1820
          %s1822 = smul.addr %s27, 4
          %s1823 = smul.addr %s1822, 32
          %s1824 = scalar_lea.hbm %s3, %s1823
          %s1826 = sshll.u32 %s1815, 4
          %s1827 = int_to_ptr.vmem [resolvable:$true] %s1826
          %1829 = dma.vmem_to_hbm [thread:$0]  %s1827, 128, %s1824, %s1812
        $region56: #{tpu_custom_call.1} parent=31 // pred_fallthru
          _
      $region32: #{tpu_custom_call.1} parent=5 // pred_fallthru
        _
      %p1830 = scmp.le.s32.totalorder 2, %s18
      // Predicated region
      $region57: #{tpu_custom_call.1} parent=5 // pred_check
        %p1831 = pneg %p1830
      $region58: #{tpu_custom_call.1} parent=5 // pred_check_branch
        %1833 = sbr.rel (%p1831) target = $region60
      $region59: #{tpu_custom_call.1} parent=5 // pred_region
        %s1834 = ssub.s32 %s18, 2
        // Predicated region
        $region61: #{tpu_custom_call.1} parent=59 // pred_check
          %p1835 = pneg %p141
        $region62: #{tpu_custom_call.1} parent=59 // pred_check_branch
          %1837 = sbr.rel (%p1835) target = $region64
        $region63: #{tpu_custom_call.1} parent=59 // pred_region
          %s1838 = sand.u32 %s126, 1
          %s1839 = scalar_lea.sflag [#allocation5], %s1838
          %s1840 = sand.u32 %s126, 1
          %s1841 = smul.addr %s1840, 8
          %s1842 = scalar_lea.vmem [#allocation9], %s1841
          %1843 = dma.done %s1839, 128
        $region64: #{tpu_custom_call.1} parent=59 // pred_fallthru
          _
      $region60: #{tpu_custom_call.1} parent=5 // pred_fallthru
        _
    $region6: #{tpu_custom_call.1} parent=1 // loop_footer
      %s22 = sadd.s32 1, %s18
    $region7: #{tpu_custom_call.1} parent=1 // loop_footer_branch
      %17 = sbr.rel target = $region3
    $region8: #{tpu_custom_call.1} parent=1 // loop_exit
      _
    %1844 = vsyncpa [#allocation4], 1
    %s1845 = scalar_lea.sflag [#allocation4], 1
    %1846 = vsyncpa %s1845, 1
    %1847 = vsyncpa [#allocation7], 1
    %s1848 = scalar_lea.sflag [#allocation7], 1
    %1849 = vsyncpa %s1848, 1
    %1850 = vsyncpa [#allocation5], 1
    %s1851 = scalar_lea.sflag [#allocation5], 1
    %1852 = vsyncpa %s1851, 1

</llo_original>
